<compile_context>
chip_gen: v6e
topology: v6e:2x2x1
jax: 0.10.0
libtpu: 0.0.40
codegen_flags: <defaults>
</compile_context>

<pallas_src>
import math
from functools import partial

import jax
import jax.numpy as jnp
from jax import lax
from jax.experimental import pallas as pl
from jax.experimental.pallas import tpu as pltpu


# ---------------------------------------------------------------------------
# helpers
# ---------------------------------------------------------------------------
def _pick_block(dim, target, multiple):
    """Largest multiple-of-`multiple` block <= target that divides dim, else dim."""
    if dim <= target:
        return dim
    start = target - (target % multiple)
    for cand in range(start, 0, -multiple):
        if dim % cand == 0:
            return cand
    return dim


def _vmem_limit(*buffer_bytes):
    """Scoped-VMEM budget from actual buffer sizes (+ headroom), capped for v7x."""
    need = sum(int(b) for b in buffer_bytes) + (8 << 20)
    return int(min(64 << 20, max(32 << 20, need)))


def _default_blocks():
    """(flash tile, projection row tile) per TPU generation."""
    try:
        kind = jax.devices()[0].device_kind.lower()
    except Exception:  # pragma: no cover
        kind = ""
    if "v5" in kind:      # v5e: 4x128^2 MXU, single vst slot -> keep 128 tiles
        return 128, 256
    return 256, 512       # v6e / v7x: fill the 256-wide MXU, bigger HBM tiles


# ---------------------------------------------------------------------------
# Linear: y = x @ W + b, tiled over rows and output columns
# ---------------------------------------------------------------------------
def _linear_kernel(x_ref, w_ref, b_ref, o_ref):
    acc = jnp.dot(x_ref[...], w_ref[...], preferred_element_type=jnp.float32)
    o_ref[...] = (acc + b_ref[...]).astype(o_ref.dtype)


def _linear(x2d, w, b, *, out_dtype, block_m, block_n):
    M, K = x2d.shape
    K2, N = w.shape
    assert K == K2
    bm = _pick_block(M, block_m, 8)
    bn = _pick_block(N, block_n, 128)
    grid = (M // bm, N // bn)
    out_isz = jnp.dtype(out_dtype).itemsize
    vmem = _vmem_limit(
        2 * bm * K * x2d.dtype.itemsize,   # x tile (double-buffered)
        2 * K * bn * w.dtype.itemsize,     # weight tile
        2 * bn * 4,                        # bias tile (f32)
        2 * bm * bn * out_isz,             # out tile
        bm * bn * 4)                       # f32 accumulator
    return pl.pallas_call(
        _linear_kernel,
        out_shape=jax.ShapeDtypeStruct((M, N), out_dtype),
        grid_spec=pltpu.PrefetchScalarGridSpec(
            num_scalar_prefetch=0,
            grid=grid,
            in_specs=[
                pl.BlockSpec((bm, K), lambda i, j: (i, 0)),   # x rows stream
                pl.BlockSpec((K, bn), lambda i, j: (0, j)),   # weight, N-tiled
                pl.BlockSpec((1, bn), lambda i, j: (0, j)),   # bias
            ],
            out_specs=pl.BlockSpec((bm, bn), lambda i, j: (i, j)),
        ),
        compiler_params=pltpu.CompilerParams(
            dimension_semantics=("parallel", "parallel"),
            vmem_limit_bytes=vmem),
        cost_estimate=pl.CostEstimate(
            flops=2 * M * K * N,
            transcendentals=0,
            bytes_accessed=(M * K + K * N * (M // bm) + N) * x2d.dtype.itemsize
                           + M * N * out_isz),
    )(x2d, w, b.reshape(1, N).astype(jnp.float32))


# ---------------------------------------------------------------------------
# Flash-style causal attention, head layout fused into the BlockSpecs
# ---------------------------------------------------------------------------
def _flash_kernel(q_ref, k_ref, v_ref, o_ref, *, bt, scale):
    # q_ref: (bt, hd) -- this (b, h, iq) query tile (already the head slice)
    # k_ref, v_ref: (T, hd) -- full K/V slabs for this (b, h), VMEM resident
    # o_ref: (bt, hd) -- head slice of the merged (B*T, C) output slab
    iq = pl.program_id(2)
    hd = q_ref.shape[-1]
    compute_dtype = q_ref.dtype

    # Fold the softmax scale into q once per tile (bt x hd) instead of scaling
    # every (bt, bt) f32 score tile.
    q = (q_ref[...] * jnp.float32(scale)).astype(compute_dtype)

    def contribute(k_tile, v_tile, mask, carry):
        m_prev, l_prev, acc_prev = carry
        # QK^T: contract last dims of both operands -> MXU, no transpose.
        s = lax.dot_general(q, k_tile, (((1,), (1,)), ((), ())),
                            preferred_element_type=jnp.float32)      # (bt, bt)
        if mask is not None:
            s = jnp.where(mask, s, -jnp.inf)
        m_new = jnp.maximum(m_prev, jnp.max(s, axis=-1, keepdims=True))
        alpha = jnp.exp(m_prev - m_new)                               # (bt, 1)
        p = jnp.exp(s - m_new)                                        # (bt, bt) f32
        l_new = alpha * l_prev + jnp.sum(p, axis=-1, keepdims=True)
        acc_new = alpha * acc_prev + jnp.dot(
            p.astype(v_tile.dtype), v_tile, preferred_element_type=jnp.float32)
        return m_new, l_new, acc_new

    m0 = jnp.full((bt, 1), -jnp.inf, jnp.float32)
    l0 = jnp.zeros((bt, 1), jnp.float32)
    a0 = jnp.zeros((bt, hd), jnp.float32)

    # 1) fully-visible KV blocks strictly below the diagonal (no mask).
    #    Softmax state is carried in vregs; above-diagonal blocks never run.
    def body(ik, carry):
        start = pl.multiple_of(ik * bt, bt)
        return contribute(k_ref[pl.ds(start, bt), :],
                          v_ref[pl.ds(start, bt), :], None, carry)

    m, l, acc = lax.fori_loop(0, iq, body, (m0, l0, a0))

    # 2) the single diagonal block, with a static lower-triangular mask
    #    (row >= col within the block, since bq == bk).  The diagonal always
    #    contributes an unmasked column per row, so m stays NaN-safe even when
    #    iq == 0 and the running max is still -inf.
    tri = (lax.broadcasted_iota(jnp.int32, (bt, bt), 0)
           >= lax.broadcasted_iota(jnp.int32, (bt, bt), 1))
    dstart = pl.multiple_of(iq * bt, bt)
    m, l, acc = contribute(k_ref[pl.ds(dstart, bt), :],
                           v_ref[pl.ds(dstart, bt), :], tri, (m, l, acc))

    # 3) finalize with an exact divide (runs once per q tile; negligible cost,
    #    avoids the approx-reciprocal error flagged in review).
    o_ref[...] = (acc / l).astype(o_ref.dtype)


def _flash_attention_fused(qkv2d, *, B, T, n_head, hd, block_t, out_dtype):
    """qkv2d: (B*T, 3*n_head*hd) with GPT-2 c_attn column layout [q | k | v].
    Returns the causal attention output as a merged-head (B*T, n_head*hd) slab."""
    C = n_head * hd
    bt = _pick_block(T, block_t, 128)
    nq = T // bt
    scale = 1.0 / math.sqrt(hd)
    out_isz = jnp.dtype(out_dtype).itemsize

    kernel = partial(_flash_kernel, bt=bt, scale=scale)

    vmem = _vmem_limit(
        2 * bt * hd * qkv2d.dtype.itemsize,       # q tile (double-buffered)
        2 * 2 * T * hd * qkv2d.dtype.itemsize,    # K + V slabs
        2 * bt * hd * out_isz,                    # out tile
        3 * bt * bt * 4,                          # f32 score/prob working set
        2 * bt * hd * 4)                          # f32 accumulator carries

    return pl.pallas_call(
        kernel,
        out_shape=jax.ShapeDtypeStruct((B * T, C), out_dtype),
        grid_spec=pltpu.PrefetchScalarGridSpec(
            num_scalar_prefetch=0,
            grid=(B, n_head, nq),
            in_specs=[
                # q tile: rows of (b, iq), columns of head h inside the Q slot.
                pl.BlockSpec((bt, hd), lambda b, h, iq: (b * nq + iq, h)),
                # K slab: all T rows of batch b, head h columns inside the K
                # slot.  Index map ignores iq -> DMA'd once per (b, h).
                pl.BlockSpec((T, hd), lambda b, h, iq: (b, n_head + h)),
                # V slab.
                pl.BlockSpec((T, hd), lambda b, h, iq: (b, 2 * n_head + h)),
            ],
            # Output written directly into the merged (B*T, C) layout.
            out_specs=pl.BlockSpec((bt, hd), lambda b, h, iq: (b * nq + iq, h)),
        ),
        compiler_params=pltpu.CompilerParams(
            # Shard only the uniform-work axes (B, H) across cores; causal work
            # grows with iq, so the q-tile axis stays "arbitrary".
            dimension_semantics=("parallel", "parallel", "arbitrary"),
            vmem_limit_bytes=vmem),
        cost_estimate=pl.CostEstimate(
            flops=2 * B * n_head * T * T * hd,           # QK^T + PV, causal-halved
            transcendentals=B * n_head * T * T // 2,
            bytes_accessed=3 * B * T * C * qkv2d.dtype.itemsize
                           + B * T * C * out_isz),
    )(qkv2d, qkv2d, qkv2d)


# ---------------------------------------------------------------------------
# Full module forward
# ---------------------------------------------------------------------------
def causal_self_attention(x, w_qkv, b_qkv, w_proj, b_proj, n_head,
                          *, compute_dtype=jnp.bfloat16,
                          block_t=None, block_m=None):
    B, T, C = x.shape
    assert C % n_head == 0
    hd = C // n_head
    # The fused head-layout path slices (*, hd) column blocks out of the qkv
    # slab, so head_dim must be lane-dense.
    # TODO(synk): add a transpose-based fallback for head_dim % 128 != 0
    # (e.g. GPT-2's hd=64) instead of requiring lane-dense heads.
    assert hd % 128 == 0, "fused head-layout path requires head_dim % 128 == 0"
    out_dtype = x.dtype

    if block_t is None or block_m is None:
        dt, dm = _default_blocks()
        block_t = block_t if block_t is not None else dt
        block_m = block_m if block_m is not None else dm

    # bf16 MXU operands everywhere; accumulation stays f32 inside the kernels.
    xc = x.astype(compute_dtype)
    wqkv = w_qkv.astype(compute_dtype)
    wproj = w_proj.astype(compute_dtype)

    # 1) fused QKV projection, tiled over B*T rows and 3C columns -> (B*T, 3C)
    qkv = _linear(xc.reshape(B * T, C), wqkv, b_qkv,
                  out_dtype=compute_dtype, block_m=block_m, block_n=block_m)

    # 2) flash causal attention reading q/k/v straight out of the qkv slab and
    #    writing a merged-head (B*T, C) slab (no head split/merge HBM passes)
    y = _flash_attention_fused(qkv, B=B, T=T, n_head=n_head, hd=hd,
                               block_t=block_t, out_dtype=compute_dtype)

    # 3) output projection consumes the merged slab directly
    out = _linear(y, wproj, b_proj, out_dtype=out_dtype,
                  block_m=block_m, block_n=block_m)
    return out.reshape(B, T, C)


# ---------------------------------------------------------------------------
# Pure-JAX reference matching the PyTorch forward
# ---------------------------------------------------------------------------
def reference_attention(x, w_qkv, b_qkv, w_proj, b_proj, n_head):
    B, T, C = x.shape
    hd = C // n_head
    qkv = x @ w_qkv + b_qkv                                 # (B, T, 3C)
    q, k, v = jnp.split(qkv, 3, axis=-1)
    q = q.reshape(B, T, n_head, hd).transpose(0, 2, 1, 3)
    k = k.reshape(B, T, n_head, hd).transpose(0, 2, 1, 3)
    v = v.reshape(B, T, n_head, hd).transpose(0, 2, 1, 3)
    s = jnp.einsum("bhqd,bhkd->bhqk", q, k) / math.sqrt(hd)
    mask = jnp.tril(jnp.ones((T, T), dtype=bool))
    s = jnp.where(mask[None, None], s, -jnp.inf)
    p = jax.nn.softmax(s, axis=-1)
    y = jnp.einsum("bhqk,bhkd->bhqd", p, v)
    y = y.transpose(0, 2, 1, 3).reshape(B, T, C)
    return y @ w_proj + b_proj


if __name__ == "__main__":
    # small GPT-2-like shapes (scaled-down n_embd / block_size, lane-dense
    # head_dim so the fused layout path is exercised; T chosen so that both the
    # full-block fori_loop path and the diagonal path run)
    B, T, C, n_head = 2, 512, 256, 2

    key = jax.random.PRNGKey(0)
    kx, k1, k2, k3, k4 = jax.random.split(key, 5)

    x = jax.random.normal(kx, (B, T, C), dtype=jnp.float32)

    # nn.Linear-like deterministic init (uniform(-1/sqrt(in), 1/sqrt(in)))
    lim = 1.0 / math.sqrt(C)
    w_qkv = jax.random.uniform(k1, (C, 3 * C), jnp.float32, -lim, lim)
    b_qkv = jax.random.uniform(k2, (3 * C,), jnp.float32, -lim, lim)
    w_proj = jax.random.uniform(k3, (C, C), jnp.float32, -lim, lim)
    b_proj = jax.random.uniform(k4, (C,), jnp.float32, -lim, lim)

    out = causal_self_attention(x, w_qkv, b_qkv, w_proj, b_proj, n_head)
    out = jax.block_until_ready(out)

    ref = reference_attention(x, w_qkv, b_qkv, w_proj, b_proj, n_head)
    assert out.shape == (B, T, C)
    # bf16 MXU operands with f32 accumulation -> bf16-level tolerance vs f32 ref
    assert jnp.allclose(out, ref, atol=5e-2, rtol=5e-2), \
        f"max err {jnp.max(jnp.abs(out - ref))}"

    print("KERNEL_OK")
</pallas_src>

<mosaic_0001>
module attributes {stable_mosaic.version = 11 : i64} {
  func.func @_linear_kernel(%arg0: i32, %arg1: i32, %arg2: memref<512x256xbf16, #tpu.memory_space<vmem>>, %arg3: memref<256x384xbf16, #tpu.memory_space<vmem>>, %arg4: memref<1x384xf32, #tpu.memory_space<vmem>>, %arg5: memref<512x384xbf16, #tpu.memory_space<vmem>>) attributes {dimension_semantics = [#tpu.dimension_semantics<parallel>, #tpu.dimension_semantics<parallel>], iteration_bounds = array<i64: 2, 2>, scalar_prefetch = 0 : i64, scratch_operands = 0 : i64, tpu.core_type = #tpu.core_type<tc>, window_params = [{transform_indices = @transform_0, window_bounds = array<i64: 512, 256>}, {transform_indices = @transform_1, window_bounds = array<i64: 256, 384>}, {transform_indices = @transform_2, window_bounds = array<i64: 1, 384>}, {transform_indices = @transform_3, window_bounds = array<i64: 512, 384>}]} {
    %c0 = arith.constant 0 : index
    %c0_0 = arith.constant 0 : index
    %0 = vector.load %arg2[%c0, %c0_0] : memref<512x256xbf16, #tpu.memory_space<vmem>>, vector<512x256xbf16>
    %c0_1 = arith.constant 0 : index
    %c0_2 = arith.constant 0 : index
    %1 = vector.load %arg3[%c0_1, %c0_2] : memref<256x384xbf16, #tpu.memory_space<vmem>>, vector<256x384xbf16>
    %cst = arith.constant dense<0.000000e+00> : vector<512x384xf32>
    %2 = tpu.matmul %0, %1, %cst {dimension_numbers = #tpu.dot_dimension_numbers<[1], [0], [0], [1], [0, 0, 1, 1], [], []>} : vector<512x256xbf16>, vector<256x384xbf16>, vector<512x384xf32> -> vector<512x384xf32>
    %c0_3 = arith.constant 0 : index
    %c0_4 = arith.constant 0 : index
    %3 = vector.load %arg4[%c0_3, %c0_4] : memref<1x384xf32, #tpu.memory_space<vmem>>, vector<1x384xf32>
    %4 = vector.broadcast %3 : vector<1x384xf32> to vector<512x384xf32>
    %5 = arith.addf %2, %4 : vector<512x384xf32>
    %6 = arith.truncf %5 : vector<512x384xf32> to vector<512x384xbf16>
    %c0_5 = arith.constant 0 : index
    %c0_6 = arith.constant 0 : index
    %7 = vector.load %arg5[%c0_5, %c0_6] : memref<512x384xbf16, #tpu.memory_space<vmem>>, vector<512x384xbf16>
    tpu.vector_store %arg5[%c0_5, %c0_6], %6 {strides = array<i32>} : memref<512x384xbf16, #tpu.memory_space<vmem>>, vector<512x384xbf16>,
    return
  }
  func.func @transform_0(%arg0: i32, %arg1: i32) -> (i32, i32) {
    %c0_i32 = arith.constant 0 : i32
    %c0_i32_0 = arith.constant 0 : i32
    return %arg0, %c0_i32 : i32, i32
  }
  func.func @transform_1(%arg0: i32, %arg1: i32) -> (i32, i32) {
    %c0_i32 = arith.constant 0 : i32
    %c0_i32_0 = arith.constant 0 : i32
    return %c0_i32, %arg1 : i32, i32
  }
  func.func @transform_2(%arg0: i32, %arg1: i32) -> (i32, i32) {
    %c0_i32 = arith.constant 0 : i32
    %c0_i32_0 = arith.constant 0 : i32
    return %c0_i32, %arg1 : i32, i32
  }
  func.func @transform_3(%arg0: i32, %arg1: i32) -> (i32, i32) {
    %c0_i32 = arith.constant 0 : i32
    return %arg0, %arg1 : i32, i32
  }
}

</mosaic_0001>

<llo_original>
// kernel: tpu_custom_call.1
$region0: #{tpu_custom_call.1}
  #allocation0 [shape = 'u32[]', space=smem, size = 0x4, offset = 0x4, fixed_abs, tag = 'smem constant byte address 0x4 - core index']
  #allocation1 [shape = 'u32[144,128]{1,0:T(1,128)}', space=vmem, size = 0x12000, scoped, tag = 'internal scratch']
  %s0 = inlined_call_operand.hbm [shape: bf16[1024,256], index: 0, kind: input, shape index: {}]
  %s1 = inlined_call_operand.hbm [shape: bf16[256,768], index: 1, kind: input, shape index: {}]
  %s2 = inlined_call_operand.hbm [shape: f32[1,768], index: 2, kind: input, shape index: {}]
  %s3 = inlined_call_operand.hbm [shape: bf16[1024,768], index: 3, kind: output, shape index: {}]
  %s4 = sld [smem:[#allocation0]]
  $region57: #{tpu_custom_call.1} parent=0
    _
  %s6 = ssub.s32 1, %s4
  %s7 = scalar_select 0, %s6, %s4
  $region1: #{tpu_custom_call.1} parent=0
    #allocation2 [shape = 'u8[524288]{0}', space=vmem, size = 0x80000, scoped, tag = 'input window, operand 0']
    #allocation3 [shape = 's32[2]{0}', space=sflag, size = 0x8, scoped, tag = 'scoped memory for tpu_custom_call.1']
    #allocation4 [shape = 's32[2]{0}', space=sflag, size = 0x8, scoped, tag = 'scoped memory for tpu_custom_call.1']
    #allocation5 [shape = 'u8[393216]{0}', space=vmem, size = 0x60000, scoped, tag = 'input window, operand 1']
    #allocation6 [shape = 's32[2]{0}', space=sflag, size = 0x8, scoped, tag = 'scoped memory for tpu_custom_call.1']
    #allocation7 [shape = 'u8[3072]{0}', space=vmem, size = 0xc00, scoped, tag = 'input window, operand 2']
    #allocation8 [shape = 'u8[786432]{0}', space=vmem, size = 0xc0000, scoped, tag = 'output window, operand 0']
    %8 = vsyncpa [#allocation3], 0
    %s9 = scalar_lea.sflag [#allocation3], 1
    %10 = vsyncpa %s9, 0
    %11 = vsyncpa [#allocation6], 0
    %s12 = scalar_lea.sflag [#allocation6], 1
    %13 = vsyncpa %s12, 0
    %14 = vsyncpa [#allocation4], 0
    %s15 = scalar_lea.sflag [#allocation4], 1
    %16 = vsyncpa %s15, 0
    loop: start=0, step=1, limit=6
    $region2: #{tpu_custom_call.1} parent=1 // loop_pre_header
      _
    $region3: #{tpu_custom_call.1} parent=1 // loop_header
      %s18 = sphi 0, %s22
      %p19 = scmp.ge.s32.totalorder %s18, 6
      %s25 = sphi 0, %s37
      %s26 = sphi 0, %s33
      %s27 = sphi 0, %s25
      %s28 = sphi 0, %s26
      %s29 = sphi 0, %s27
      %s30 = sphi 0, %s28
      %s40 = sphi 0, %s42
      %s43 = sphi 0, %s40
      %s44 = sphi 0, %s43
      %s60 = sphi 0, %s44
      %s66 = sphi 0, %s68
      %s69 = sphi 0, %s66
      %s70 = sphi 0, %s69
      %s86 = sphi 0, %s70
      %s92 = sphi 0, %s94
      %s95 = sphi 0, %s92
      %s96 = sphi 0, %s95
      %s112 = sphi 0, %s96
      %s120 = sphi 0, %s122
      %s123 = sphi 0, %s120
      %s124 = sphi 0, %s123
      %s140 = sphi 0, %s124
    $region4: #{tpu_custom_call.1} parent=1 // loop_header_branch
      %21 = sbr.rel (%p19) target = $region8
    $region5: #{tpu_custom_call.1} parent=1 // loop_body
      %s23 = ssub.s32 %s18, 1
      %s24 = ssub.s32 %s18, 2
      %s31 = sadd.s32 1, %s26
      %p32 = scmp.ge.s32.totalorder %s31, 2
      %s33 = scalar_select %p32, 0, %s31
      %s34 = sadd.s32 1, %s25
      %s35 = scalar_select %p32, %s34, %s25
      %p36 = scmp.ge.s32.totalorder %s35, 2
      %s37 = scalar_select %p36, 0, %s35
      %s38 = ssub.s32 %s25, %s37
      %p39 = scmp.eq.s32.totalorder %s38, 0
      %s41 = sadd.s32 %s40, 1
      %s42 = scalar_select %p39, %s40, %s41
      %p45 = pneg %p39
      %p46 = scmp.eq.s32.totalorder %s18, 3
      %p47 = por %p45, %p46
      %p48 = scmp.ne.s32.totalorder %s40, %s43
      %p49 = scmp.eq.s32.totalorder %s18, 0
      %p50 = por %p48, %p49
      %p51 = scmp.ne.s32.totalorder %s40, %s43
      %p52 = scmp.eq.s32.totalorder %s23, 3
      %p53 = por %p51, %p52
      %p54 = scmp.ne.s32.totalorder %s43, %s44
      %p55 = scmp.eq.s32.totalorder %s23, 0
      %p56 = por %p54, %p55
      %p57 = scmp.ne.s32.totalorder %s43, %s44
      %p58 = scmp.eq.s32.totalorder %s24, 3
      %p59 = por %p57, %p58
      %p61 = scmp.ne.s32.totalorder %s44, %s60
      %p62 = scmp.eq.s32.totalorder %s24, 0
      %p63 = por %p61, %p62
      %s64 = ssub.s32 %s26, %s33
      %p65 = scmp.eq.s32.totalorder %s64, 0
      %s67 = sadd.s32 %s66, 1
      %s68 = scalar_select %p65, %s66, %s67
      %p71 = pneg %p65
      %p72 = scmp.eq.s32.totalorder %s18, 3
      %p73 = por %p71, %p72
      %p74 = scmp.ne.s32.totalorder %s66, %s69
      %p75 = scmp.eq.s32.totalorder %s18, 0
      %p76 = por %p74, %p75
      %p77 = scmp.ne.s32.totalorder %s66, %s69
      %p78 = scmp.eq.s32.totalorder %s23, 3
      %p79 = por %p77, %p78
      %p80 = scmp.ne.s32.totalorder %s69, %s70
      %p81 = scmp.eq.s32.totalorder %s23, 0
      %p82 = por %p80, %p81
      %p83 = scmp.ne.s32.totalorder %s69, %s70
      %p84 = scmp.eq.s32.totalorder %s24, 3
      %p85 = por %p83, %p84
      %p87 = scmp.ne.s32.totalorder %s70, %s86
      %p88 = scmp.eq.s32.totalorder %s24, 0
      %p89 = por %p87, %p88
      %s90 = ssub.s32 %s26, %s33
      %p91 = scmp.eq.s32.totalorder %s90, 0
      %s93 = sadd.s32 %s92, 1
      %s94 = scalar_select %p91, %s92, %s93
      %p97 = pneg %p91
      %p98 = scmp.eq.s32.totalorder %s18, 3
      %p99 = por %p97, %p98
      %p100 = scmp.ne.s32.totalorder %s92, %s95
      %p101 = scmp.eq.s32.totalorder %s18, 0
      %p102 = por %p100, %p101
      %p103 = scmp.ne.s32.totalorder %s92, %s95
      %p104 = scmp.eq.s32.totalorder %s23, 3
      %p105 = por %p103, %p104
      %p106 = scmp.ne.s32.totalorder %s95, %s96
      %p107 = scmp.eq.s32.totalorder %s23, 0
      %p108 = por %p106, %p107
      %p109 = scmp.ne.s32.totalorder %s95, %s96
      %p110 = scmp.eq.s32.totalorder %s24, 3
      %p111 = por %p109, %p110
      %p113 = scmp.ne.s32.totalorder %s96, %s112
      %p114 = scmp.eq.s32.totalorder %s24, 0
      %p115 = por %p113, %p114
      %s116 = ssub.s32 %s25, %s37
      %s117 = ssub.s32 %s26, %s33
      %s118 = sor.u32 %s116, %s117
      %p119 = scmp.eq.s32.totalorder %s118, 0
      %s121 = sadd.s32 %s120, 1
      %s122 = scalar_select %p119, %s120, %s121
      %p125 = pneg %p119
      %p126 = scmp.eq.s32.totalorder %s18, 3
      %p127 = por %p125, %p126
      %p128 = scmp.ne.s32.totalorder %s120, %s123
      %p129 = scmp.eq.s32.totalorder %s18, 0
      %p130 = por %p128, %p129
      %p131 = scmp.ne.s32.totalorder %s120, %s123
      %p132 = scmp.eq.s32.totalorder %s23, 3
      %p133 = por %p131, %p132
      %p134 = scmp.ne.s32.totalorder %s123, %s124
      %p135 = scmp.eq.s32.totalorder %s23, 0
      %p136 = por %p134, %p135
      %p137 = scmp.ne.s32.totalorder %s123, %s124
      %p138 = scmp.eq.s32.totalorder %s24, 3
      %p139 = por %p137, %p138
      %p141 = scmp.ne.s32.totalorder %s124, %s140
      %p142 = scmp.eq.s32.totalorder %s24, 0
      %p143 = por %p141, %p142
      %p144 = scmp.le.s32.totalorder 1, %s18
      %p145 = scmp.lt.s32.totalorder %s18, 5
      %p146 = pnand %p144, %p145
      %p147 = pneg %p146
      // Predicated region
      $region9: #{tpu_custom_call.1} parent=5 // pred_check
        _
      $region10: #{tpu_custom_call.1} parent=5 // pred_check_branch
        %149 = sbr.rel (%p146) target = $region12
      $region11: #{tpu_custom_call.1} parent=5 // pred_region
        %s150 = ssub.s32 %s18, 1
      $region12: #{tpu_custom_call.1} parent=5 // pred_fallthru
        _
      %p151 = scmp.lt.s32.totalorder %s18, 4
      // Predicated region
      $region13: #{tpu_custom_call.1} parent=5 // pred_check
        %p152 = pneg %p151
      $region14: #{tpu_custom_call.1} parent=5 // pred_check_branch
        %154 = sbr.rel (%p152) target = $region16
      $region15: #{tpu_custom_call.1} parent=5 // pred_region
        // Predicated region
        $region17: #{tpu_custom_call.1} parent=15 // pred_check
          %p155 = pneg %p50
        $region18: #{tpu_custom_call.1} parent=15 // pred_check_branch
          %157 = sbr.rel (%p155) target = $region20
        $region19: #{tpu_custom_call.1} parent=15 // pred_region
          %s158 = sand.u32 %s40, 1
          %s159 = scalar_lea.sflag [#allocation3], %s158
          %s160 = sand.u32 %s40, 1
          %s161 = smul.addr %s160, 512
          %s162 = scalar_lea.vmem [#allocation2], %s161
          %s163 = smul.u32 64, %s25
          %s165 = ssub.s32 8192, 8192
          %166 = vsyncadd %s159, %s165
          %s167 = smul.addr %s163, 2
          %s168 = smul.addr %s167, 64
          %s169 = scalar_lea.hbm %s0, %s168
          %s170 = sshll.u32 %s162, 4
          %s171 = int_to_ptr.vmem [resolvable:$true] %s170
          %176 = dma.hbm_to_vmem [thread:$0]  %s169, 8192, %s171, %s159, 128, 128, 8
        $region20: #{tpu_custom_call.1} parent=15 // pred_fallthru
          _
        // Predicated region
        $region21: #{tpu_custom_call.1} parent=15 // pred_check
          %p177 = pneg %p76
        $region22: #{tpu_custom_call.1} parent=15 // pred_check_branch
          %179 = sbr.rel (%p177) target = $region24
        $region23: #{tpu_custom_call.1} parent=15 // pred_region
          %s180 = sand.u32 %s18, 1
          %s181 = scalar_lea.sflag [#allocation6], %s180
          %s182 = sand.u32 %s66, 1
          %s183 = smul.addr %s182, 384
          %s184 = scalar_lea.vmem [#allocation5], %s183
          %s185 = smul.u32 3, %s26
          %s187 = ssub.s32 6144, 6144
          %188 = vsyncadd %s181, %s187
          %s189 = smul.addr %s185, 64
          %s190 = scalar_lea.hbm %s1, %s189
          %s191 = sshll.u32 %s184, 4
          %s192 = int_to_ptr.vmem [resolvable:$true] %s191
          %197 = dma.hbm_to_vmem [thread:$0]  %s190, 6144, %s192, %s181, 384, 192, 12
        $region24: #{tpu_custom_call.1} parent=15 // pred_fallthru
          _
        // Predicated region
        $region25: #{tpu_custom_call.1} parent=15 // pred_check
          %p198 = pneg %p102
        $region26: #{tpu_custom_call.1} parent=15 // pred_check_branch
          %200 = sbr.rel (%p198) target = $region28
        $region27: #{tpu_custom_call.1} parent=15 // pred_region
          %s201 = sand.u32 %s18, 1
          %s202 = scalar_lea.sflag [#allocation6], %s201
          %s203 = sand.u32 %s92, 1
          %s204 = smul.addr %s203, 3
          %s205 = scalar_lea.vmem [#allocation7], %s204
          %s206 = smul.u32 3, %s26
          %s208 = ssub.s32 48, 48
          %209 = vsyncadd %s202, %s208
          %s210 = smul.addr %s206, 16
          %s211 = scalar_lea.hbm %s2, %s210
          %s213 = sshll.u32 %s205, 4
          %s214 = int_to_ptr.vmem [resolvable:$true] %s213
          %216 = dma.hbm_to_vmem [thread:$0]  %s211, 48, %s214, %s202
        $region28: #{tpu_custom_call.1} parent=15 // pred_fallthru
          _
      $region16: #{tpu_custom_call.1} parent=5 // pred_fallthru
        _
      %p217 = scmp.le.s32.totalorder 1, %s18
      %p218 = scmp.lt.s32.totalorder %s18, 5
      %p219 = pnand %p217, %p218
      %p220 = pneg %p219
      // Predicated region
      $region29: #{tpu_custom_call.1} parent=5 // pred_check
        _
      $region30: #{tpu_custom_call.1} parent=5 // pred_check_branch
        %222 = sbr.rel (%p219) target = $region32
      $region31: #{tpu_custom_call.1} parent=5 // pred_region
        %s223 = ssub.s32 %s18, 1
        %s224 = sand.u32 %s43, 1
        %s225 = scalar_lea.sflag [#allocation3], %s224
        %s226 = sand.u32 %s43, 1
        %s227 = smul.addr %s226, 512
        %s228 = scalar_lea.vmem [#allocation2], %s227
        // Predicated region
        $region33: #{tpu_custom_call.1} parent=31 // pred_check
          %p229 = pneg %p56
        $region34: #{tpu_custom_call.1} parent=31 // pred_check_branch
          %231 = sbr.rel (%p229) target = $region36
        $region35: #{tpu_custom_call.1} parent=31 // pred_region
          %232 = dma.done %s225, 8192
        $region36: #{tpu_custom_call.1} parent=31 // pred_fallthru
          _
        %s233 = sand.u32 %s23, 1
        %s234 = scalar_lea.sflag [#allocation6], %s233
        %s235 = sand.u32 %s69, 1
        %s236 = smul.addr %s235, 384
        %s237 = scalar_lea.vmem [#allocation5], %s236
        // Predicated region
        $region37: #{tpu_custom_call.1} parent=31 // pred_check
          %p238 = pneg %p82
        $region38: #{tpu_custom_call.1} parent=31 // pred_check_branch
          %240 = sbr.rel (%p238) target = $region40
        $region39: #{tpu_custom_call.1} parent=31 // pred_region
          %241 = dma.done %s234, 6144
        $region40: #{tpu_custom_call.1} parent=31 // pred_fallthru
          _
        %s242 = sand.u32 %s23, 1
        %s243 = scalar_lea.sflag [#allocation6], %s242
        %s244 = sand.u32 %s95, 1
        %s245 = smul.addr %s244, 3
        %s246 = scalar_lea.vmem [#allocation7], %s245
        // Predicated region
        $region41: #{tpu_custom_call.1} parent=31 // pred_check
          %p247 = pneg %p108
        $region42: #{tpu_custom_call.1} parent=31 // pred_check_branch
          %249 = sbr.rel (%p247) target = $region44
        $region43: #{tpu_custom_call.1} parent=31 // pred_region
          %250 = dma.done %s243, 48
        $region44: #{tpu_custom_call.1} parent=31 // pred_fallthru
          _
        %s251 = sand.u32 %s43, 1
        %s252 = scalar_lea.sflag [#allocation3], %s251
        %s253 = sand.u32 %s43, 1
        %s254 = smul.addr %s253, 512
        %s255 = scalar_lea.vmem [#allocation2], %s254
        %p256 = pneg %p56
        %p257 = pneg %p53
        %s258 = sand.u32 %s23, 1
        %s259 = scalar_lea.sflag [#allocation6], %s258
        %s260 = sand.u32 %s69, 1
        %s261 = smul.addr %s260, 384
        %s262 = scalar_lea.vmem [#allocation5], %s261
        %p263 = pneg %p82
        %p264 = pneg %p79
        %s265 = sand.u32 %s23, 1
        %s266 = scalar_lea.sflag [#allocation6], %s265
        %s267 = sand.u32 %s95, 1
        %s268 = smul.addr %s267, 3
        %s269 = scalar_lea.vmem [#allocation7], %s268
        %p270 = pneg %p108
        %p271 = pneg %p105
        %p272 = pneg %p136
        %p273 = pneg %p133
        %s274 = sand.u32 %s123, 1
        %s275 = scalar_lea.sflag [#allocation4], %s274
        %s276 = sand.u32 %s123, 1
        %s277 = smul.addr %s276, 768
        %s278 = scalar_lea.vmem [#allocation8], %s277
        %s279 = smul.u32 64, %s27
        %s280 = smul.u32 3, %s28
        %s281 = smul.u32 3, %s28
        %s282 = smul.u32 64, %s27
        %s283 = smul.u32 3, %s28
        %v285 = vld [vmem:[%s228] sm:$0xff]
        %v286 = vld [vmem:[%s228 + $0x8] sm:$0xff]
        %v287 = vld [vmem:[%s228 + $0x10] sm:$0xff]
        %v288 = vld [vmem:[%s228 + $0x18] sm:$0xff]
        %v289 = vld [vmem:[%s228 + $0x20] sm:$0xff]
        %v290 = vld [vmem:[%s228 + $0x28] sm:$0xff]
        %v291 = vld [vmem:[%s228 + $0x30] sm:$0xff]
        %v292 = vld [vmem:[%s228 + $0x38] sm:$0xff]
        %v293 = vld [vmem:[%s228 + $0x40] sm:$0xff]
        %v294 = vld [vmem:[%s228 + $0x48] sm:$0xff]
        %v295 = vld [vmem:[%s228 + $0x50] sm:$0xff]
        %v296 = vld [vmem:[%s228 + $0x58] sm:$0xff]
        %v297 = vld [vmem:[%s228 + $0x60] sm:$0xff]
        %v298 = vld [vmem:[%s228 + $0x68] sm:$0xff]
        %v299 = vld [vmem:[%s228 + $0x70] sm:$0xff]
        %v300 = vld [vmem:[%s228 + $0x78] sm:$0xff]
        %v301 = vld [vmem:[%s228 + $0x80] sm:$0xff]
        %v302 = vld [vmem:[%s228 + $0x88] sm:$0xff]
        %v303 = vld [vmem:[%s228 + $0x90] sm:$0xff]
        %v304 = vld [vmem:[%s228 + $0x98] sm:$0xff]
        %v305 = vld [vmem:[%s228 + $0xa0] sm:$0xff]
        %v306 = vld [vmem:[%s228 + $0xa8] sm:$0xff]
        %v307 = vld [vmem:[%s228 + $0xb0] sm:$0xff]
        %v308 = vld [vmem:[%s228 + $0xb8] sm:$0xff]
        %v309 = vld [vmem:[%s228 + $0xc0] sm:$0xff]
        %v310 = vld [vmem:[%s228 + $0xc8] sm:$0xff]
        %v311 = vld [vmem:[%s228 + $0xd0] sm:$0xff]
        %v312 = vld [vmem:[%s228 + $0xd8] sm:$0xff]
        %v313 = vld [vmem:[%s228 + $0xe0] sm:$0xff]
        %v314 = vld [vmem:[%s228 + $0xe8] sm:$0xff]
        %v315 = vld [vmem:[%s228 + $0xf0] sm:$0xff]
        %v316 = vld [vmem:[%s228 + $0xf8] sm:$0xff]
        %v317 = vld [vmem:[%s228 + $0x100] sm:$0xff]
        %v318 = vld [vmem:[%s228 + $0x108] sm:$0xff]
        %v319 = vld [vmem:[%s228 + $0x110] sm:$0xff]
        %v320 = vld [vmem:[%s228 + $0x118] sm:$0xff]
        %v321 = vld [vmem:[%s228 + $0x120] sm:$0xff]
        %v322 = vld [vmem:[%s228 + $0x128] sm:$0xff]
        %v323 = vld [vmem:[%s228 + $0x130] sm:$0xff]
        %v324 = vld [vmem:[%s228 + $0x138] sm:$0xff]
        %v325 = vld [vmem:[%s228 + $0x140] sm:$0xff]
        %v326 = vld [vmem:[%s228 + $0x148] sm:$0xff]
        %v327 = vld [vmem:[%s228 + $0x150] sm:$0xff]
        %v328 = vld [vmem:[%s228 + $0x158] sm:$0xff]
        %v329 = vld [vmem:[%s228 + $0x160] sm:$0xff]
        %v330 = vld [vmem:[%s228 + $0x168] sm:$0xff]
        %v331 = vld [vmem:[%s228 + $0x170] sm:$0xff]
        %v332 = vld [vmem:[%s228 + $0x178] sm:$0xff]
        %v333 = vld [vmem:[%s228 + $0x180] sm:$0xff]
        %v334 = vld [vmem:[%s228 + $0x188] sm:$0xff]
        %v335 = vld [vmem:[%s228 + $0x190] sm:$0xff]
        %v336 = vld [vmem:[%s228 + $0x198] sm:$0xff]
        %v337 = vld [vmem:[%s228 + $0x1a0] sm:$0xff]
        %v338 = vld [vmem:[%s228 + $0x1a8] sm:$0xff]
        %v339 = vld [vmem:[%s228 + $0x1b0] sm:$0xff]
        %v340 = vld [vmem:[%s228 + $0x1b8] sm:$0xff]
        %v341 = vld [vmem:[%s228 + $0x1c0] sm:$0xff]
        %v342 = vld [vmem:[%s228 + $0x1c8] sm:$0xff]
        %v343 = vld [vmem:[%s228 + $0x1d0] sm:$0xff]
        %v344 = vld [vmem:[%s228 + $0x1d8] sm:$0xff]
        %v345 = vld [vmem:[%s228 + $0x1e0] sm:$0xff]
        %v346 = vld [vmem:[%s228 + $0x1e8] sm:$0xff]
        %v347 = vld [vmem:[%s228 + $0x1f0] sm:$0xff]
        %v348 = vld [vmem:[%s228 + $0x1f8] sm:$0xff]
        %v349 = vld [vmem:[%s237] sm:$0xff]
        %v350 = vld [vmem:[%s237 + $0x8] sm:$0xf]
        %v351 = vld [vmem:[%s237 + $0xc] sm:$0xff]
        %v352 = vld [vmem:[%s237 + $0x14] sm:$0xf]
        %v353 = vld [vmem:[%s237 + $0x18] sm:$0xff]
        %v354 = vld [vmem:[%s237 + $0x20] sm:$0xf]
        %v355 = vld [vmem:[%s237 + $0x24] sm:$0xff]
        %v356 = vld [vmem:[%s237 + $0x2c] sm:$0xf]
        %v357 = vld [vmem:[%s237 + $0x30] sm:$0xff]
        %v358 = vld [vmem:[%s237 + $0x38] sm:$0xf]
        %v359 = vld [vmem:[%s237 + $0x3c] sm:$0xff]
        %v360 = vld [vmem:[%s237 + $0x44] sm:$0xf]
        %v361 = vld [vmem:[%s237 + $0x48] sm:$0xff]
        %v362 = vld [vmem:[%s237 + $0x50] sm:$0xf]
        %v363 = vld [vmem:[%s237 + $0x54] sm:$0xff]
        %v364 = vld [vmem:[%s237 + $0x5c] sm:$0xf]
        %v365 = vld [vmem:[%s237 + $0x60] sm:$0xff]
        %v366 = vld [vmem:[%s237 + $0x68] sm:$0xf]
        %v367 = vld [vmem:[%s237 + $0x6c] sm:$0xff]
        %v368 = vld [vmem:[%s237 + $0x74] sm:$0xf]
        %v369 = vld [vmem:[%s237 + $0x78] sm:$0xff]
        %v370 = vld [vmem:[%s237 + $0x80] sm:$0xf]
        %v371 = vld [vmem:[%s237 + $0x84] sm:$0xff]
        %v372 = vld [vmem:[%s237 + $0x8c] sm:$0xf]
        %v373 = vld [vmem:[%s237 + $0x90] sm:$0xff]
        %v374 = vld [vmem:[%s237 + $0x98] sm:$0xf]
        %v375 = vld [vmem:[%s237 + $0x9c] sm:$0xff]
        %v376 = vld [vmem:[%s237 + $0xa4] sm:$0xf]
        %v377 = vld [vmem:[%s237 + $0xa8] sm:$0xff]
        %v378 = vld [vmem:[%s237 + $0xb0] sm:$0xf]
        %v379 = vld [vmem:[%s237 + $0xb4] sm:$0xff]
        %v380 = vld [vmem:[%s237 + $0xbc] sm:$0xf]
        %v381 = vld [vmem:[%s237 + $0xc0] sm:$0xff]
        %v382 = vld [vmem:[%s237 + $0xc8] sm:$0xf]
        %v383 = vld [vmem:[%s237 + $0xcc] sm:$0xff]
        %v384 = vld [vmem:[%s237 + $0xd4] sm:$0xf]
        %v385 = vld [vmem:[%s237 + $0xd8] sm:$0xff]
        %v386 = vld [vmem:[%s237 + $0xe0] sm:$0xf]
        %v387 = vld [vmem:[%s237 + $0xe4] sm:$0xff]
        %v388 = vld [vmem:[%s237 + $0xec] sm:$0xf]
        %v389 = vld [vmem:[%s237 + $0xf0] sm:$0xff]
        %v390 = vld [vmem:[%s237 + $0xf8] sm:$0xf]
        %v391 = vld [vmem:[%s237 + $0xfc] sm:$0xff]
        %v392 = vld [vmem:[%s237 + $0x104] sm:$0xf]
        %v393 = vld [vmem:[%s237 + $0x108] sm:$0xff]
        %v394 = vld [vmem:[%s237 + $0x110] sm:$0xf]
        %v395 = vld [vmem:[%s237 + $0x114] sm:$0xff]
        %v396 = vld [vmem:[%s237 + $0x11c] sm:$0xf]
        %v397 = vld [vmem:[%s237 + $0x120] sm:$0xff]
        %v398 = vld [vmem:[%s237 + $0x128] sm:$0xf]
        %v399 = vld [vmem:[%s237 + $0x12c] sm:$0xff]
        %v400 = vld [vmem:[%s237 + $0x134] sm:$0xf]
        %v401 = vld [vmem:[%s237 + $0x138] sm:$0xff]
        %v402 = vld [vmem:[%s237 + $0x140] sm:$0xf]
        %v403 = vld [vmem:[%s237 + $0x144] sm:$0xff]
        %v404 = vld [vmem:[%s237 + $0x14c] sm:$0xf]
        %v405 = vld [vmem:[%s237 + $0x150] sm:$0xff]
        %v406 = vld [vmem:[%s237 + $0x158] sm:$0xf]
        %v407 = vld [vmem:[%s237 + $0x15c] sm:$0xff]
        %v408 = vld [vmem:[%s237 + $0x164] sm:$0xf]
        %v409 = vld [vmem:[%s237 + $0x168] sm:$0xff]
        %v410 = vld [vmem:[%s237 + $0x170] sm:$0xf]
        %v411 = vld [vmem:[%s237 + $0x174] sm:$0xff]
        %v412 = vld [vmem:[%s237 + $0x17c] sm:$0xf]
        %v413 = vld [vmem:[%s246] sm:$0x7]
        %v415 = vlaneseq
        %v416 = vshrl.u32 %v415, 7
        %v417 = vsub.s32 0, %v416
        %v418 = vrot.slane %v413, %v417
        %v419 = vlaneseq
        %v420 = vshrl.u32 %v419, 7
        %v421 = vsub.s32 1, %v420
        %v422 = vrot.slane %v413, %v421
        %v423 = vlaneseq
        %v424 = vshrl.u32 %v423, 7
        %v425 = vsub.s32 2, %v424
        %v426 = vrot.slane %v413, %v425
        %v494 = vunpack.c.l.b16 %v285
        %v495 = vunpack.c.h.b16 %v285
        %v496 = vunpack.c.l.b16 %v286
        %v497 = vunpack.c.h.b16 %v286
        %v498 = vunpack.c.l.b16 %v287
        %v499 = vunpack.c.h.b16 %v287
        %v500 = vunpack.c.l.b16 %v288
        %v501 = vunpack.c.h.b16 %v288
        %v502 = vunpack.c.l.b16 %v289
        %v503 = vunpack.c.h.b16 %v289
        %v504 = vunpack.c.l.b16 %v290
        %v505 = vunpack.c.h.b16 %v290
        %v506 = vunpack.c.l.b16 %v291
        %v507 = vunpack.c.h.b16 %v291
        %v508 = vunpack.c.l.b16 %v292
        %v509 = vunpack.c.h.b16 %v292
        %v510 = vunpack.c.l.b16 %v293
        %v511 = vunpack.c.h.b16 %v293
        %v512 = vunpack.c.l.b16 %v294
        %v513 = vunpack.c.h.b16 %v294
        %v514 = vunpack.c.l.b16 %v295
        %v515 = vunpack.c.h.b16 %v295
        %v516 = vunpack.c.l.b16 %v296
        %v517 = vunpack.c.h.b16 %v296
        %v518 = vunpack.c.l.b16 %v297
        %v519 = vunpack.c.h.b16 %v297
        %v520 = vunpack.c.l.b16 %v298
        %v521 = vunpack.c.h.b16 %v298
        %v522 = vunpack.c.l.b16 %v299
        %v523 = vunpack.c.h.b16 %v299
        %v524 = vunpack.c.l.b16 %v300
        %v525 = vunpack.c.h.b16 %v300
        %v526 = vunpack.c.l.b16 %v301
        %v527 = vunpack.c.h.b16 %v301
        %v528 = vunpack.c.l.b16 %v302
        %v529 = vunpack.c.h.b16 %v302
        %v530 = vunpack.c.l.b16 %v303
        %v531 = vunpack.c.h.b16 %v303
        %v532 = vunpack.c.l.b16 %v304
        %v533 = vunpack.c.h.b16 %v304
        %v534 = vunpack.c.l.b16 %v305
        %v535 = vunpack.c.h.b16 %v305
        %v536 = vunpack.c.l.b16 %v306
        %v537 = vunpack.c.h.b16 %v306
        %v538 = vunpack.c.l.b16 %v307
        %v539 = vunpack.c.h.b16 %v307
        %v540 = vunpack.c.l.b16 %v308
        %v541 = vunpack.c.h.b16 %v308
        %v542 = vunpack.c.l.b16 %v309
        %v543 = vunpack.c.h.b16 %v309
        %v544 = vunpack.c.l.b16 %v310
        %v545 = vunpack.c.h.b16 %v310
        %v546 = vunpack.c.l.b16 %v311
        %v547 = vunpack.c.h.b16 %v311
        %v548 = vunpack.c.l.b16 %v312
        %v549 = vunpack.c.h.b16 %v312
        %v550 = vunpack.c.l.b16 %v313
        %v551 = vunpack.c.h.b16 %v313
        %v552 = vunpack.c.l.b16 %v314
        %v553 = vunpack.c.h.b16 %v314
        %v554 = vunpack.c.l.b16 %v315
        %v555 = vunpack.c.h.b16 %v315
        %v556 = vunpack.c.l.b16 %v316
        %v557 = vunpack.c.h.b16 %v316
        %v558 = vunpack.c.l.b16 %v317
        %v559 = vunpack.c.h.b16 %v317
        %v560 = vunpack.c.l.b16 %v318
        %v561 = vunpack.c.h.b16 %v318
        %v562 = vunpack.c.l.b16 %v319
        %v563 = vunpack.c.h.b16 %v319
        %v564 = vunpack.c.l.b16 %v320
        %v565 = vunpack.c.h.b16 %v320
        %v566 = vunpack.c.l.b16 %v321
        %v567 = vunpack.c.h.b16 %v321
        %v568 = vunpack.c.l.b16 %v322
        %v569 = vunpack.c.h.b16 %v322
        %v570 = vunpack.c.l.b16 %v323
        %v571 = vunpack.c.h.b16 %v323
        %v572 = vunpack.c.l.b16 %v324
        %v573 = vunpack.c.h.b16 %v324
        %v574 = vunpack.c.l.b16 %v325
        %v575 = vunpack.c.h.b16 %v325
        %v576 = vunpack.c.l.b16 %v326
        %v577 = vunpack.c.h.b16 %v326
        %v578 = vunpack.c.l.b16 %v327
        %v579 = vunpack.c.h.b16 %v327
        %v580 = vunpack.c.l.b16 %v328
        %v581 = vunpack.c.h.b16 %v328
        %v582 = vunpack.c.l.b16 %v329
        %v583 = vunpack.c.h.b16 %v329
        %v584 = vunpack.c.l.b16 %v330
        %v585 = vunpack.c.h.b16 %v330
        %v586 = vunpack.c.l.b16 %v331
        %v587 = vunpack.c.h.b16 %v331
        %v588 = vunpack.c.l.b16 %v332
        %v589 = vunpack.c.h.b16 %v332
        %v590 = vunpack.c.l.b16 %v333
        %v591 = vunpack.c.h.b16 %v333
        %v592 = vunpack.c.l.b16 %v334
        %v593 = vunpack.c.h.b16 %v334
        %v594 = vunpack.c.l.b16 %v335
        %v595 = vunpack.c.h.b16 %v335
        %v596 = vunpack.c.l.b16 %v336
        %v597 = vunpack.c.h.b16 %v336
        %v598 = vunpack.c.l.b16 %v337
        %v599 = vunpack.c.h.b16 %v337
        %v600 = vunpack.c.l.b16 %v338
        %v601 = vunpack.c.h.b16 %v338
        %v602 = vunpack.c.l.b16 %v339
        %v603 = vunpack.c.h.b16 %v339
        %v604 = vunpack.c.l.b16 %v340
        %v605 = vunpack.c.h.b16 %v340
        %v606 = vunpack.c.l.b16 %v341
        %v607 = vunpack.c.h.b16 %v341
        %v608 = vunpack.c.l.b16 %v342
        %v609 = vunpack.c.h.b16 %v342
        %v610 = vunpack.c.l.b16 %v343
        %v611 = vunpack.c.h.b16 %v343
        %v612 = vunpack.c.l.b16 %v344
        %v613 = vunpack.c.h.b16 %v344
        %v614 = vunpack.c.l.b16 %v345
        %v615 = vunpack.c.h.b16 %v345
        %v616 = vunpack.c.l.b16 %v346
        %v617 = vunpack.c.h.b16 %v346
        %v618 = vunpack.c.l.b16 %v347
        %v619 = vunpack.c.h.b16 %v347
        %v620 = vunpack.c.l.b16 %v348
        %v621 = vunpack.c.h.b16 %v348
        %v622 = vpack.c.b16 %v496, %v494
        %v623 = vpack.c.b16 %v497, %v495
        %v624 = vpack.c.b16 %v500, %v498
        %v625 = vpack.c.b16 %v501, %v499
        %v626 = vpack.c.b16 %v504, %v502
        %v627 = vpack.c.b16 %v505, %v503
        %v628 = vpack.c.b16 %v508, %v506
        %v629 = vpack.c.b16 %v509, %v507
        %v630 = vpack.c.b16 %v512, %v510
        %v631 = vpack.c.b16 %v513, %v511
        %v632 = vpack.c.b16 %v516, %v514
        %v633 = vpack.c.b16 %v517, %v515
        %v634 = vpack.c.b16 %v520, %v518
        %v635 = vpack.c.b16 %v521, %v519
        %v636 = vpack.c.b16 %v524, %v522
        %v637 = vpack.c.b16 %v525, %v523
        %v638 = vpack.c.b16 %v528, %v526
        %v639 = vpack.c.b16 %v529, %v527
        %v640 = vpack.c.b16 %v532, %v530
        %v641 = vpack.c.b16 %v533, %v531
        %v642 = vpack.c.b16 %v536, %v534
        %v643 = vpack.c.b16 %v537, %v535
        %v644 = vpack.c.b16 %v540, %v538
        %v645 = vpack.c.b16 %v541, %v539
        %v646 = vpack.c.b16 %v544, %v542
        %v647 = vpack.c.b16 %v545, %v543
        %v648 = vpack.c.b16 %v548, %v546
        %v649 = vpack.c.b16 %v549, %v547
        %v650 = vpack.c.b16 %v552, %v550
        %v651 = vpack.c.b16 %v553, %v551
        %v652 = vpack.c.b16 %v556, %v554
        %v653 = vpack.c.b16 %v557, %v555
        %v654 = vpack.c.b16 %v560, %v558
        %v655 = vpack.c.b16 %v561, %v559
        %v656 = vpack.c.b16 %v564, %v562
        %v657 = vpack.c.b16 %v565, %v563
        %v658 = vpack.c.b16 %v568, %v566
        %v659 = vpack.c.b16 %v569, %v567
        %v660 = vpack.c.b16 %v572, %v570
        %v661 = vpack.c.b16 %v573, %v571
        %v662 = vpack.c.b16 %v576, %v574
        %v663 = vpack.c.b16 %v577, %v575
        %v664 = vpack.c.b16 %v580, %v578
        %v665 = vpack.c.b16 %v581, %v579
        %v666 = vpack.c.b16 %v584, %v582
        %v667 = vpack.c.b16 %v585, %v583
        %v668 = vpack.c.b16 %v588, %v586
        %v669 = vpack.c.b16 %v589, %v587
        %v670 = vpack.c.b16 %v592, %v590
        %v671 = vpack.c.b16 %v593, %v591
        %v672 = vpack.c.b16 %v596, %v594
        %v673 = vpack.c.b16 %v597, %v595
        %v674 = vpack.c.b16 %v600, %v598
        %v675 = vpack.c.b16 %v601, %v599
        %v676 = vpack.c.b16 %v604, %v602
        %v677 = vpack.c.b16 %v605, %v603
        %v678 = vpack.c.b16 %v608, %v606
        %v679 = vpack.c.b16 %v609, %v607
        %v680 = vpack.c.b16 %v612, %v610
        %v681 = vpack.c.b16 %v613, %v611
        %v682 = vpack.c.b16 %v616, %v614
        %v683 = vpack.c.b16 %v617, %v615
        %v684 = vpack.c.b16 %v620, %v618
        %v685 = vpack.c.b16 %v621, %v619
        %v814 = vunpack.c.l.b16 %v349
        %v815 = vunpack.c.h.b16 %v349
        %v816 = vunpack.c.l.b16 %v350
        %v817 = vunpack.c.l.b16 %v351
        %v818 = vunpack.c.h.b16 %v351
        %v819 = vunpack.c.l.b16 %v352
        %v820 = vunpack.c.l.b16 %v353
        %v821 = vunpack.c.h.b16 %v353
        %v822 = vunpack.c.l.b16 %v354
        %v823 = vunpack.c.l.b16 %v355
        %v824 = vunpack.c.h.b16 %v355
        %v825 = vunpack.c.l.b16 %v356
        %v826 = vunpack.c.l.b16 %v357
        %v827 = vunpack.c.h.b16 %v357
        %v828 = vunpack.c.l.b16 %v358
        %v829 = vunpack.c.l.b16 %v359
        %v830 = vunpack.c.h.b16 %v359
        %v831 = vunpack.c.l.b16 %v360
        %v832 = vunpack.c.l.b16 %v361
        %v833 = vunpack.c.h.b16 %v361
        %v834 = vunpack.c.l.b16 %v362
        %v835 = vunpack.c.l.b16 %v363
        %v836 = vunpack.c.h.b16 %v363
        %v837 = vunpack.c.l.b16 %v364
        %v838 = vunpack.c.l.b16 %v365
        %v839 = vunpack.c.h.b16 %v365
        %v840 = vunpack.c.l.b16 %v366
        %v841 = vunpack.c.l.b16 %v367
        %v842 = vunpack.c.h.b16 %v367
        %v843 = vunpack.c.l.b16 %v368
        %v844 = vunpack.c.l.b16 %v369
        %v845 = vunpack.c.h.b16 %v369
        %v846 = vunpack.c.l.b16 %v370
        %v847 = vunpack.c.l.b16 %v371
        %v848 = vunpack.c.h.b16 %v371
        %v849 = vunpack.c.l.b16 %v372
        %v850 = vunpack.c.l.b16 %v373
        %v851 = vunpack.c.h.b16 %v373
        %v852 = vunpack.c.l.b16 %v374
        %v853 = vunpack.c.l.b16 %v375
        %v854 = vunpack.c.h.b16 %v375
        %v855 = vunpack.c.l.b16 %v376
        %v856 = vunpack.c.l.b16 %v377
        %v857 = vunpack.c.h.b16 %v377
        %v858 = vunpack.c.l.b16 %v378
        %v859 = vunpack.c.l.b16 %v379
        %v860 = vunpack.c.h.b16 %v379
        %v861 = vunpack.c.l.b16 %v380
        %v862 = vunpack.c.l.b16 %v381
        %v863 = vunpack.c.h.b16 %v381
        %v864 = vunpack.c.l.b16 %v382
        %v865 = vunpack.c.l.b16 %v383
        %v866 = vunpack.c.h.b16 %v383
        %v867 = vunpack.c.l.b16 %v384
        %v868 = vunpack.c.l.b16 %v385
        %v869 = vunpack.c.h.b16 %v385
        %v870 = vunpack.c.l.b16 %v386
        %v871 = vunpack.c.l.b16 %v387
        %v872 = vunpack.c.h.b16 %v387
        %v873 = vunpack.c.l.b16 %v388
        %v874 = vunpack.c.l.b16 %v389
        %v875 = vunpack.c.h.b16 %v389
        %v876 = vunpack.c.l.b16 %v390
        %v877 = vunpack.c.l.b16 %v391
        %v878 = vunpack.c.h.b16 %v391
        %v879 = vunpack.c.l.b16 %v392
        %v880 = vunpack.c.l.b16 %v393
        %v881 = vunpack.c.h.b16 %v393
        %v882 = vunpack.c.l.b16 %v394
        %v883 = vunpack.c.l.b16 %v395
        %v884 = vunpack.c.h.b16 %v395
        %v885 = vunpack.c.l.b16 %v396
        %v886 = vunpack.c.l.b16 %v397
        %v887 = vunpack.c.h.b16 %v397
        %v888 = vunpack.c.l.b16 %v398
        %v889 = vunpack.c.l.b16 %v399
        %v890 = vunpack.c.h.b16 %v399
        %v891 = vunpack.c.l.b16 %v400
        %v892 = vunpack.c.l.b16 %v401
        %v893 = vunpack.c.h.b16 %v401
        %v894 = vunpack.c.l.b16 %v402
        %v895 = vunpack.c.l.b16 %v403
        %v896 = vunpack.c.h.b16 %v403
        %v897 = vunpack.c.l.b16 %v404
        %v898 = vunpack.c.l.b16 %v405
        %v899 = vunpack.c.h.b16 %v405
        %v900 = vunpack.c.l.b16 %v406
        %v901 = vunpack.c.l.b16 %v407
        %v902 = vunpack.c.h.b16 %v407
        %v903 = vunpack.c.l.b16 %v408
        %v904 = vunpack.c.l.b16 %v409
        %v905 = vunpack.c.h.b16 %v409
        %v906 = vunpack.c.l.b16 %v410
        %v907 = vunpack.c.l.b16 %v411
        %v908 = vunpack.c.h.b16 %v411
        %v909 = vunpack.c.l.b16 %v412
        %v910 = vpack.c.b16 %v817, %v814
        %v911 = vpack.c.b16 %v818, %v815
        %v912 = vpack.c.b16 %v819, %v816
        %v913 = vpack.c.b16 %v823, %v820
        %v914 = vpack.c.b16 %v824, %v821
        %v915 = vpack.c.b16 %v825, %v822
        %v916 = vpack.c.b16 %v829, %v826
        %v917 = vpack.c.b16 %v830, %v827
        %v918 = vpack.c.b16 %v831, %v828
        %v919 = vpack.c.b16 %v835, %v832
        %v920 = vpack.c.b16 %v836, %v833
        %v921 = vpack.c.b16 %v837, %v834
        %v922 = vpack.c.b16 %v841, %v838
        %v923 = vpack.c.b16 %v842, %v839
        %v924 = vpack.c.b16 %v843, %v840
        %v925 = vpack.c.b16 %v847, %v844
        %v926 = vpack.c.b16 %v848, %v845
        %v927 = vpack.c.b16 %v849, %v846
        %v928 = vpack.c.b16 %v853, %v850
        %v929 = vpack.c.b16 %v854, %v851
        %v930 = vpack.c.b16 %v855, %v852
        %v931 = vpack.c.b16 %v859, %v856
        %v932 = vpack.c.b16 %v860, %v857
        %v933 = vpack.c.b16 %v861, %v858
        %v934 = vpack.c.b16 %v865, %v862
        %v935 = vpack.c.b16 %v866, %v863
        %v936 = vpack.c.b16 %v867, %v864
        %v937 = vpack.c.b16 %v871, %v868
        %v938 = vpack.c.b16 %v872, %v869
        %v939 = vpack.c.b16 %v873, %v870
        %v940 = vpack.c.b16 %v877, %v874
        %v941 = vpack.c.b16 %v878, %v875
        %v942 = vpack.c.b16 %v879, %v876
        %v943 = vpack.c.b16 %v883, %v880
        %v944 = vpack.c.b16 %v884, %v881
        %v945 = vpack.c.b16 %v885, %v882
        %v946 = vpack.c.b16 %v889, %v886
        %v947 = vpack.c.b16 %v890, %v887
        %v948 = vpack.c.b16 %v891, %v888
        %v949 = vpack.c.b16 %v895, %v892
        %v950 = vpack.c.b16 %v896, %v893
        %v951 = vpack.c.b16 %v897, %v894
        %v952 = vpack.c.b16 %v901, %v898
        %v953 = vpack.c.b16 %v902, %v899
        %v954 = vpack.c.b16 %v903, %v900
        %v955 = vpack.c.b16 %v907, %v904
        %v956 = vpack.c.b16 %v908, %v905
        %v957 = vpack.c.b16 %v909, %v906
        %1006 = vmatprep.subr.bf16.mxu0 %v932
        %1007 = vmatpush1.bf16.msra.mxu0 %v931
        %1008 = vmatprep.subr.bf16.mxu0 %v929
        %1009 = vmatpush1.bf16.msra.mxu0 %v928
        %1010 = vmatprep.subr.bf16.mxu0 %v926
        %1011 = vmatpush1.bf16.msra.mxu0 %v925
        %1012 = vmatprep.subr.bf16.mxu0 %v923
        %1013 = vmatpush1.bf16.msra.mxu0 %v922
        %1014 = vmatprep.subr.bf16.mxu0 %v920
        %1015 = vmatpush1.bf16.msra.mxu0 %v919
        %1016 = vmatprep.subr.bf16.mxu0 %v917
        %1017 = vmatpush1.bf16.msra.mxu0 %v916
        %1018 = vmatprep.subr.bf16.mxu0 %v914
        %1019 = vmatpush1.bf16.msra.mxu0 %v913
        %1020 = vmatprep.subr.bf16.mxu0 %v911
        %1021 = vmatpush1.bf16.msra.mxu0 %v910
        %1022 = vmatprep.subr.bf16.mxu0 %v956
        %1023 = vmatpush2.bf16.msra.mxu0 %v955
        %1024 = vmatprep.subr.bf16.mxu0 %v953
        %1025 = vmatpush2.bf16.msra.mxu0 %v952
        %1026 = vmatprep.subr.bf16.mxu0 %v950
        %1027 = vmatpush2.bf16.msra.mxu0 %v949
        %1028 = vmatprep.subr.bf16.mxu0 %v947
        %1029 = vmatpush2.bf16.msra.mxu0 %v946
        %1030 = vmatprep.subr.bf16.mxu0 %v944
        %1031 = vmatpush2.bf16.msra.mxu0 %v943
        %1032 = vmatprep.subr.bf16.mxu0 %v941
        %1033 = vmatpush2.bf16.msra.mxu0 %v940
        %1034 = vmatprep.subr.bf16.mxu0 %v938
        %1035 = vmatpush2.bf16.msra.mxu0 %v937
        %1036 = vmatprep.subr.bf16.mxu0 %v935
        %1037 = vmatpush2.bf16.msra.mxu0 %v934
        %1038 = vmatprep.mubr.bf16.mxu0 %v623
        %1039 = vmatmul.mubr.bf16.gmra.mxu0 %v622
        %v1040 = vpop.f32.mrf.mxu0
        %v1041 = vadd.f32 %v418, %v1040
        %v1042 = vpop.f32.mrf.mxu0
        %v1043 = vadd.f32 %v422, %v1042
        %v1044 = vpop.f32.mrf.mxu0
        %v1045 = vadd.f32 %v418, %v1044
        %v1046 = vpop.f32.mrf.mxu0
        %v1047 = vadd.f32 %v422, %v1046
        %1048 = vmatprep.mubr.bf16.mxu0 %v625
        %1049 = vmatmul.mubr.bf16.gmra.mxu0 %v624
        %v1050 = vpop.f32.mrf.mxu0
        %v1051 = vadd.f32 %v418, %v1050
        %v1052 = vpop.f32.mrf.mxu0
        %v1053 = vadd.f32 %v422, %v1052
        %v1054 = vpop.f32.mrf.mxu0
        %v1055 = vadd.f32 %v418, %v1054
        %v1056 = vpop.f32.mrf.mxu0
        %v1057 = vadd.f32 %v422, %v1056
        %1058 = vmatprep.mubr.bf16.mxu0 %v627
        %1059 = vmatmul.mubr.bf16.gmra.mxu0 %v626
        %v1060 = vpop.f32.mrf.mxu0
        %v1061 = vadd.f32 %v418, %v1060
        %v1062 = vpop.f32.mrf.mxu0
        %v1063 = vadd.f32 %v422, %v1062
        %v1064 = vpop.f32.mrf.mxu0
        %v1065 = vadd.f32 %v418, %v1064
        %v1066 = vpop.f32.mrf.mxu0
        %v1067 = vadd.f32 %v422, %v1066
        %1068 = vmatprep.mubr.bf16.mxu0 %v629
        %1069 = vmatmul.mubr.bf16.gmra.mxu0 %v628
        %v1070 = vpop.f32.mrf.mxu0
        %v1071 = vadd.f32 %v418, %v1070
        %v1072 = vpop.f32.mrf.mxu0
        %v1073 = vadd.f32 %v422, %v1072
        %v1074 = vpop.f32.mrf.mxu0
        %v1075 = vadd.f32 %v418, %v1074
        %v1076 = vpop.f32.mrf.mxu0
        %v1077 = vadd.f32 %v422, %v1076
        %1078 = vmatprep.mubr.bf16.mxu0 %v631
        %1079 = vmatmul.mubr.bf16.gmra.mxu0 %v630
        %v1080 = vpop.f32.mrf.mxu0
        %v1081 = vadd.f32 %v418, %v1080
        %v1082 = vpop.f32.mrf.mxu0
        %v1083 = vadd.f32 %v422, %v1082
        %v1084 = vpop.f32.mrf.mxu0
        %v1085 = vadd.f32 %v418, %v1084
        %v1086 = vpop.f32.mrf.mxu0
        %v1087 = vadd.f32 %v422, %v1086
        %1088 = vmatprep.mubr.bf16.mxu0 %v633
        %1089 = vmatmul.mubr.bf16.gmra.mxu0 %v632
        %v1090 = vpop.f32.mrf.mxu0
        %v1091 = vadd.f32 %v418, %v1090
        %v1092 = vpop.f32.mrf.mxu0
        %v1093 = vadd.f32 %v422, %v1092
        %v1094 = vpop.f32.mrf.mxu0
        %v1095 = vadd.f32 %v418, %v1094
        %v1096 = vpop.f32.mrf.mxu0
        %v1097 = vadd.f32 %v422, %v1096
        %1098 = vmatprep.mubr.bf16.mxu0 %v635
        %1099 = vmatmul.mubr.bf16.gmra.mxu0 %v634
        %v1100 = vpop.f32.mrf.mxu0
        %v1101 = vadd.f32 %v418, %v1100
        %v1102 = vpop.f32.mrf.mxu0
        %v1103 = vadd.f32 %v422, %v1102
        %v1104 = vpop.f32.mrf.mxu0
        %v1105 = vadd.f32 %v418, %v1104
        %v1106 = vpop.f32.mrf.mxu0
        %v1107 = vadd.f32 %v422, %v1106
        %1108 = vmatprep.mubr.bf16.mxu0 %v637
        %1109 = vmatmul.mubr.bf16.gmra.mxu0 %v636
        %v1110 = vpop.f32.mrf.mxu0
        %v1111 = vadd.f32 %v418, %v1110
        %v1112 = vpop.f32.mrf.mxu0
        %v1113 = vadd.f32 %v422, %v1112
        %v1114 = vpop.f32.mrf.mxu0
        %v1115 = vadd.f32 %v418, %v1114
        %v1116 = vpop.f32.mrf.mxu0
        %v1117 = vadd.f32 %v422, %v1116
        %1118 = vmatprep.mubr.bf16.mxu0 %v639
        %1119 = vmatmul.mubr.bf16.gmra.mxu0 %v638
        %v1120 = vpop.f32.mrf.mxu0
        %v1121 = vadd.f32 %v418, %v1120
        %v1122 = vpop.f32.mrf.mxu0
        %v1123 = vadd.f32 %v422, %v1122
        %v1124 = vpop.f32.mrf.mxu0
        %v1125 = vadd.f32 %v418, %v1124
        %v1126 = vpop.f32.mrf.mxu0
        %v1127 = vadd.f32 %v422, %v1126
        %1128 = vmatprep.mubr.bf16.mxu0 %v641
        %1129 = vmatmul.mubr.bf16.gmra.mxu0 %v640
        %v1130 = vpop.f32.mrf.mxu0
        %v1131 = vadd.f32 %v418, %v1130
        %v1132 = vpop.f32.mrf.mxu0
        %v1133 = vadd.f32 %v422, %v1132
        %v1134 = vpop.f32.mrf.mxu0
        %v1135 = vadd.f32 %v418, %v1134
        %v1136 = vpop.f32.mrf.mxu0
        %v1137 = vadd.f32 %v422, %v1136
        %1138 = vmatprep.mubr.bf16.mxu0 %v643
        %1139 = vmatmul.mubr.bf16.gmra.mxu0 %v642
        %v1140 = vpop.f32.mrf.mxu0
        %v1141 = vadd.f32 %v418, %v1140
        %v1142 = vpop.f32.mrf.mxu0
        %v1143 = vadd.f32 %v422, %v1142
        %v1144 = vpop.f32.mrf.mxu0
        %v1145 = vadd.f32 %v418, %v1144
        %v1146 = vpop.f32.mrf.mxu0
        %v1147 = vadd.f32 %v422, %v1146
        %1148 = vmatprep.mubr.bf16.mxu0 %v645
        %1149 = vmatmul.mubr.bf16.gmra.mxu0 %v644
        %v1150 = vpop.f32.mrf.mxu0
        %v1151 = vadd.f32 %v418, %v1150
        %v1152 = vpop.f32.mrf.mxu0
        %v1153 = vadd.f32 %v422, %v1152
        %v1154 = vpop.f32.mrf.mxu0
        %v1155 = vadd.f32 %v418, %v1154
        %v1156 = vpop.f32.mrf.mxu0
        %v1157 = vadd.f32 %v422, %v1156
        %1158 = vmatprep.mubr.bf16.mxu0 %v647
        %1159 = vmatmul.mubr.bf16.gmra.mxu0 %v646
        %v1160 = vpop.f32.mrf.mxu0
        %v1161 = vadd.f32 %v418, %v1160
        %v1162 = vpop.f32.mrf.mxu0
        %v1163 = vadd.f32 %v422, %v1162
        %v1164 = vpop.f32.mrf.mxu0
        %v1165 = vadd.f32 %v418, %v1164
        %v1166 = vpop.f32.mrf.mxu0
        %v1167 = vadd.f32 %v422, %v1166
        %1168 = vmatprep.mubr.bf16.mxu0 %v649
        %1169 = vmatmul.mubr.bf16.gmra.mxu0 %v648
        %v1170 = vpop.f32.mrf.mxu0
        %v1171 = vadd.f32 %v418, %v1170
        %v1172 = vpop.f32.mrf.mxu0
        %v1173 = vadd.f32 %v422, %v1172
        %v1174 = vpop.f32.mrf.mxu0
        %v1175 = vadd.f32 %v418, %v1174
        %v1176 = vpop.f32.mrf.mxu0
        %v1177 = vadd.f32 %v422, %v1176
        %1178 = vmatprep.mubr.bf16.mxu0 %v651
        %1179 = vmatmul.mubr.bf16.gmra.mxu0 %v650
        %v1180 = vpop.f32.mrf.mxu0
        %v1181 = vadd.f32 %v418, %v1180
        %v1182 = vpop.f32.mrf.mxu0
        %v1183 = vadd.f32 %v422, %v1182
        %v1184 = vpop.f32.mrf.mxu0
        %v1185 = vadd.f32 %v418, %v1184
        %v1186 = vpop.f32.mrf.mxu0
        %v1187 = vadd.f32 %v422, %v1186
        %1188 = vmatprep.mubr.bf16.mxu0 %v653
        %1189 = vmatmul.mubr.bf16.gmra.mxu0 %v652
        %v1190 = vpop.f32.mrf.mxu0
        %v1191 = vadd.f32 %v418, %v1190
        %v1192 = vpop.f32.mrf.mxu0
        %v1193 = vadd.f32 %v422, %v1192
        %v1194 = vpop.f32.mrf.mxu0
        %v1195 = vadd.f32 %v418, %v1194
        %v1196 = vpop.f32.mrf.mxu0
        %v1197 = vadd.f32 %v422, %v1196
        %1198 = vmatprep.mubr.bf16.mxu0 %v655
        %1199 = vmatmul.mubr.bf16.gmra.mxu0 %v654
        %v1200 = vpop.f32.mrf.mxu0
        %v1201 = vadd.f32 %v418, %v1200
        %v1202 = vpop.f32.mrf.mxu0
        %v1203 = vadd.f32 %v422, %v1202
        %v1204 = vpop.f32.mrf.mxu0
        %v1205 = vadd.f32 %v418, %v1204
        %v1206 = vpop.f32.mrf.mxu0
        %v1207 = vadd.f32 %v422, %v1206
        %1208 = vmatprep.mubr.bf16.mxu0 %v657
        %1209 = vmatmul.mubr.bf16.gmra.mxu0 %v656
        %v1210 = vpop.f32.mrf.mxu0
        %v1211 = vadd.f32 %v418, %v1210
        %v1212 = vpop.f32.mrf.mxu0
        %v1213 = vadd.f32 %v422, %v1212
        %v1214 = vpop.f32.mrf.mxu0
        %v1215 = vadd.f32 %v418, %v1214
        %v1216 = vpop.f32.mrf.mxu0
        %v1217 = vadd.f32 %v422, %v1216
        %1218 = vmatprep.mubr.bf16.mxu0 %v659
        %1219 = vmatmul.mubr.bf16.gmra.mxu0 %v658
        %v1220 = vpop.f32.mrf.mxu0
        %v1221 = vadd.f32 %v418, %v1220
        %v1222 = vpop.f32.mrf.mxu0
        %v1223 = vadd.f32 %v422, %v1222
        %v1224 = vpop.f32.mrf.mxu0
        %v1225 = vadd.f32 %v418, %v1224
        %v1226 = vpop.f32.mrf.mxu0
        %v1227 = vadd.f32 %v422, %v1226
        %1228 = vmatprep.mubr.bf16.mxu0 %v661
        %1229 = vmatmul.mubr.bf16.gmra.mxu0 %v660
        %v1230 = vpop.f32.mrf.mxu0
        %v1231 = vadd.f32 %v418, %v1230
        %v1232 = vpop.f32.mrf.mxu0
        %v1233 = vadd.f32 %v422, %v1232
        %v1234 = vpop.f32.mrf.mxu0
        %v1235 = vadd.f32 %v418, %v1234
        %v1236 = vpop.f32.mrf.mxu0
        %v1237 = vadd.f32 %v422, %v1236
        %1238 = vmatprep.mubr.bf16.mxu0 %v663
        %1239 = vmatmul.mubr.bf16.gmra.mxu0 %v662
        %v1240 = vpop.f32.mrf.mxu0
        %v1241 = vadd.f32 %v418, %v1240
        %v1242 = vpop.f32.mrf.mxu0
        %v1243 = vadd.f32 %v422, %v1242
        %v1244 = vpop.f32.mrf.mxu0
        %v1245 = vadd.f32 %v418, %v1244
        %v1246 = vpop.f32.mrf.mxu0
        %v1247 = vadd.f32 %v422, %v1246
        %1248 = vmatprep.mubr.bf16.mxu0 %v665
        %1249 = vmatmul.mubr.bf16.gmra.mxu0 %v664
        %v1250 = vpop.f32.mrf.mxu0
        %v1251 = vadd.f32 %v418, %v1250
        %v1252 = vpop.f32.mrf.mxu0
        %v1253 = vadd.f32 %v422, %v1252
        %v1254 = vpop.f32.mrf.mxu0
        %v1255 = vadd.f32 %v418, %v1254
        %v1256 = vpop.f32.mrf.mxu0
        %v1257 = vadd.f32 %v422, %v1256
        %1258 = vmatprep.mubr.bf16.mxu0 %v667
        %1259 = vmatmul.mubr.bf16.gmra.mxu0 %v666
        %v1260 = vpop.f32.mrf.mxu0
        %v1261 = vadd.f32 %v418, %v1260
        %v1262 = vpop.f32.mrf.mxu0
        %v1263 = vadd.f32 %v422, %v1262
        %v1264 = vpop.f32.mrf.mxu0
        %v1265 = vadd.f32 %v418, %v1264
        %v1266 = vpop.f32.mrf.mxu0
        %v1267 = vadd.f32 %v422, %v1266
        %1268 = vmatprep.mubr.bf16.mxu0 %v669
        %1269 = vmatmul.mubr.bf16.gmra.mxu0 %v668
        %v1270 = vpop.f32.mrf.mxu0
        %v1271 = vadd.f32 %v418, %v1270
        %v1272 = vpop.f32.mrf.mxu0
        %v1273 = vadd.f32 %v422, %v1272
        %v1274 = vpop.f32.mrf.mxu0
        %v1275 = vadd.f32 %v418, %v1274
        %v1276 = vpop.f32.mrf.mxu0
        %v1277 = vadd.f32 %v422, %v1276
        %1278 = vmatprep.mubr.bf16.mxu0 %v671
        %1279 = vmatmul.mubr.bf16.gmra.mxu0 %v670
        %v1280 = vpop.f32.mrf.mxu0
        %v1281 = vadd.f32 %v418, %v1280
        %v1282 = vpop.f32.mrf.mxu0
        %v1283 = vadd.f32 %v422, %v1282
        %v1284 = vpop.f32.mrf.mxu0
        %v1285 = vadd.f32 %v418, %v1284
        %v1286 = vpop.f32.mrf.mxu0
        %v1287 = vadd.f32 %v422, %v1286
        %1288 = vmatprep.mubr.bf16.mxu0 %v673
        %1289 = vmatmul.mubr.bf16.gmra.mxu0 %v672
        %v1290 = vpop.f32.mrf.mxu0
        %v1291 = vadd.f32 %v418, %v1290
        %v1292 = vpop.f32.mrf.mxu0
        %v1293 = vadd.f32 %v422, %v1292
        %v1294 = vpop.f32.mrf.mxu0
        %v1295 = vadd.f32 %v418, %v1294
        %v1296 = vpop.f32.mrf.mxu0
        %v1297 = vadd.f32 %v422, %v1296
        %1298 = vmatprep.mubr.bf16.mxu0 %v675
        %1299 = vmatmul.mubr.bf16.gmra.mxu0 %v674
        %v1300 = vpop.f32.mrf.mxu0
        %v1301 = vadd.f32 %v418, %v1300
        %v1302 = vpop.f32.mrf.mxu0
        %v1303 = vadd.f32 %v422, %v1302
        %v1304 = vpop.f32.mrf.mxu0
        %v1305 = vadd.f32 %v418, %v1304
        %v1306 = vpop.f32.mrf.mxu0
        %v1307 = vadd.f32 %v422, %v1306
        %1308 = vmatprep.mubr.bf16.mxu0 %v677
        %1309 = vmatmul.mubr.bf16.gmra.mxu0 %v676
        %v1310 = vpop.f32.mrf.mxu0
        %v1311 = vadd.f32 %v418, %v1310
        %v1312 = vpop.f32.mrf.mxu0
        %v1313 = vadd.f32 %v422, %v1312
        %v1314 = vpop.f32.mrf.mxu0
        %v1315 = vadd.f32 %v418, %v1314
        %v1316 = vpop.f32.mrf.mxu0
        %v1317 = vadd.f32 %v422, %v1316
        %1318 = vmatprep.mubr.bf16.mxu0 %v679
        %1319 = vmatmul.mubr.bf16.gmra.mxu0 %v678
        %v1320 = vpop.f32.mrf.mxu0
        %v1321 = vadd.f32 %v418, %v1320
        %v1322 = vpop.f32.mrf.mxu0
        %v1323 = vadd.f32 %v422, %v1322
        %v1324 = vpop.f32.mrf.mxu0
        %v1325 = vadd.f32 %v418, %v1324
        %v1326 = vpop.f32.mrf.mxu0
        %v1327 = vadd.f32 %v422, %v1326
        %1328 = vmatprep.mubr.bf16.mxu0 %v681
        %1329 = vmatmul.mubr.bf16.gmra.mxu0 %v680
        %v1330 = vpop.f32.mrf.mxu0
        %v1331 = vadd.f32 %v418, %v1330
        %v1332 = vpop.f32.mrf.mxu0
        %v1333 = vadd.f32 %v422, %v1332
        %v1334 = vpop.f32.mrf.mxu0
        %v1335 = vadd.f32 %v418, %v1334
        %v1336 = vpop.f32.mrf.mxu0
        %v1337 = vadd.f32 %v422, %v1336
        %1338 = vmatprep.mubr.bf16.mxu0 %v683
        %1339 = vmatmul.mubr.bf16.gmra.mxu0 %v682
        %v1340 = vpop.f32.mrf.mxu0
        %v1341 = vadd.f32 %v418, %v1340
        %v1342 = vpop.f32.mrf.mxu0
        %v1343 = vadd.f32 %v422, %v1342
        %v1344 = vpop.f32.mrf.mxu0
        %v1345 = vadd.f32 %v418, %v1344
        %v1346 = vpop.f32.mrf.mxu0
        %v1347 = vadd.f32 %v422, %v1346
        %1348 = vmatprep.mubr.bf16.mxu0 %v685
        %1349 = vmatmul.mubr.bf16.gmra.mxu0 %v684
        %v1350 = vpop.f32.mrf.mxu0
        %v1351 = vadd.f32 %v418, %v1350
        %v1352 = vpop.f32.mrf.mxu0
        %v1353 = vadd.f32 %v422, %v1352
        %v1354 = vpop.f32.mrf.mxu0
        %v1355 = vadd.f32 %v418, %v1354
        %v1356 = vpop.f32.mrf.mxu0
        %v1357 = vadd.f32 %v422, %v1356
        %1358 = vdwg.mxu0
        %1359 = vmatprep.subr.bf16.mxu0 0
        %1360 = vmatpush1.bf16.msra.mxu0 %v933
        %1361 = vmatprep.subr.bf16.mxu0 0
        %1362 = vmatpush1.bf16.msra.mxu0 %v930
        %1363 = vmatprep.subr.bf16.mxu0 0
        %1364 = vmatpush1.bf16.msra.mxu0 %v927
        %1365 = vmatprep.subr.bf16.mxu0 0
        %1366 = vmatpush1.bf16.msra.mxu0 %v924
        %1367 = vmatprep.subr.bf16.mxu0 0
        %1368 = vmatpush1.bf16.msra.mxu0 %v921
        %1369 = vmatprep.subr.bf16.mxu0 0
        %1370 = vmatpush1.bf16.msra.mxu0 %v918
        %1371 = vmatprep.subr.bf16.mxu0 0
        %1372 = vmatpush1.bf16.msra.mxu0 %v915
        %1373 = vmatprep.subr.bf16.mxu0 0
        %1374 = vmatpush1.bf16.msra.mxu0 %v912
        %1375 = vmatprep.subr.bf16.mxu0 0
        %1376 = vmatpush2.bf16.msra.mxu0 %v957
        %1377 = vmatprep.subr.bf16.mxu0 0
        %1378 = vmatpush2.bf16.msra.mxu0 %v954
        %1379 = vmatprep.subr.bf16.mxu0 0
        %1380 = vmatpush2.bf16.msra.mxu0 %v951
        %1381 = vmatprep.subr.bf16.mxu0 0
        %1382 = vmatpush2.bf16.msra.mxu0 %v948
        %1383 = vmatprep.subr.bf16.mxu0 0
        %1384 = vmatpush2.bf16.msra.mxu0 %v945
        %1385 = vmatprep.subr.bf16.mxu0 0
        %1386 = vmatpush2.bf16.msra.mxu0 %v942
        %1387 = vmatprep.subr.bf16.mxu0 0
        %1388 = vmatpush2.bf16.msra.mxu0 %v939
        %1389 = vmatprep.subr.bf16.mxu0 0
        %1390 = vmatpush2.bf16.msra.mxu0 %v936
        %1391 = vmatprep.mubr.bf16.mxu0 %v623
        %1392 = vmatmul.mubr.bf16.gmra.mxu0 %v622
        %v1393 = vpop.f32.mrf.mxu0
        %v1394 = vadd.f32 %v426, %v1393
        %v1395 = vpop.f32.mrf.mxu0
        %v1396 = vpop.f32.mrf.mxu0
        %v1397 = vadd.f32 %v426, %v1396
        %v1398 = vpop.f32.mrf.mxu0
        %1399 = vmatprep.mubr.bf16.mxu0 %v625
        %1400 = vmatmul.mubr.bf16.gmra.mxu0 %v624
        %v1401 = vpop.f32.mrf.mxu0
        %v1402 = vadd.f32 %v426, %v1401
        %v1403 = vpop.f32.mrf.mxu0
        %v1404 = vpop.f32.mrf.mxu0
        %v1405 = vadd.f32 %v426, %v1404
        %v1406 = vpop.f32.mrf.mxu0
        %1407 = vmatprep.mubr.bf16.mxu0 %v627
        %1408 = vmatmul.mubr.bf16.gmra.mxu0 %v626
        %v1409 = vpop.f32.mrf.mxu0
        %v1410 = vadd.f32 %v426, %v1409
        %v1411 = vpop.f32.mrf.mxu0
        %v1412 = vpop.f32.mrf.mxu0
        %v1413 = vadd.f32 %v426, %v1412
        %v1414 = vpop.f32.mrf.mxu0
        %1415 = vmatprep.mubr.bf16.mxu0 %v629
        %1416 = vmatmul.mubr.bf16.gmra.mxu0 %v628
        %v1417 = vpop.f32.mrf.mxu0
        %v1418 = vadd.f32 %v426, %v1417
        %v1419 = vpop.f32.mrf.mxu0
        %v1420 = vpop.f32.mrf.mxu0
        %v1421 = vadd.f32 %v426, %v1420
        %v1422 = vpop.f32.mrf.mxu0
        %1423 = vmatprep.mubr.bf16.mxu0 %v631
        %1424 = vmatmul.mubr.bf16.gmra.mxu0 %v630
        %v1425 = vpop.f32.mrf.mxu0
        %v1426 = vadd.f32 %v426, %v1425
        %v1427 = vpop.f32.mrf.mxu0
        %v1428 = vpop.f32.mrf.mxu0
        %v1429 = vadd.f32 %v426, %v1428
        %v1430 = vpop.f32.mrf.mxu0
        %1431 = vmatprep.mubr.bf16.mxu0 %v633
        %1432 = vmatmul.mubr.bf16.gmra.mxu0 %v632
        %v1433 = vpop.f32.mrf.mxu0
        %v1434 = vadd.f32 %v426, %v1433
        %v1435 = vpop.f32.mrf.mxu0
        %v1436 = vpop.f32.mrf.mxu0
        %v1437 = vadd.f32 %v426, %v1436
        %v1438 = vpop.f32.mrf.mxu0
        %1439 = vmatprep.mubr.bf16.mxu0 %v635
        %1440 = vmatmul.mubr.bf16.gmra.mxu0 %v634
        %v1441 = vpop.f32.mrf.mxu0
        %v1442 = vadd.f32 %v426, %v1441
        %v1443 = vpop.f32.mrf.mxu0
        %v1444 = vpop.f32.mrf.mxu0
        %v1445 = vadd.f32 %v426, %v1444
        %v1446 = vpop.f32.mrf.mxu0
        %1447 = vmatprep.mubr.bf16.mxu0 %v637
        %1448 = vmatmul.mubr.bf16.gmra.mxu0 %v636
        %v1449 = vpop.f32.mrf.mxu0
        %v1450 = vadd.f32 %v426, %v1449
        %v1451 = vpop.f32.mrf.mxu0
        %v1452 = vpop.f32.mrf.mxu0
        %v1453 = vadd.f32 %v426, %v1452
        %v1454 = vpop.f32.mrf.mxu0
        %1455 = vmatprep.mubr.bf16.mxu0 %v639
        %1456 = vmatmul.mubr.bf16.gmra.mxu0 %v638
        %v1457 = vpop.f32.mrf.mxu0
        %v1458 = vadd.f32 %v426, %v1457
        %v1459 = vpop.f32.mrf.mxu0
        %v1460 = vpop.f32.mrf.mxu0
        %v1461 = vadd.f32 %v426, %v1460
        %v1462 = vpop.f32.mrf.mxu0
        %1463 = vmatprep.mubr.bf16.mxu0 %v641
        %1464 = vmatmul.mubr.bf16.gmra.mxu0 %v640
        %v1465 = vpop.f32.mrf.mxu0
        %v1466 = vadd.f32 %v426, %v1465
        %v1467 = vpop.f32.mrf.mxu0
        %v1468 = vpop.f32.mrf.mxu0
        %v1469 = vadd.f32 %v426, %v1468
        %v1470 = vpop.f32.mrf.mxu0
        %1471 = vmatprep.mubr.bf16.mxu0 %v643
        %1472 = vmatmul.mubr.bf16.gmra.mxu0 %v642
        %v1473 = vpop.f32.mrf.mxu0
        %v1474 = vadd.f32 %v426, %v1473
        %v1475 = vpop.f32.mrf.mxu0
        %v1476 = vpop.f32.mrf.mxu0
        %v1477 = vadd.f32 %v426, %v1476
        %v1478 = vpop.f32.mrf.mxu0
        %1479 = vmatprep.mubr.bf16.mxu0 %v645
        %1480 = vmatmul.mubr.bf16.gmra.mxu0 %v644
        %v1481 = vpop.f32.mrf.mxu0
        %v1482 = vadd.f32 %v426, %v1481
        %v1483 = vpop.f32.mrf.mxu0
        %v1484 = vpop.f32.mrf.mxu0
        %v1485 = vadd.f32 %v426, %v1484
        %v1486 = vpop.f32.mrf.mxu0
        %1487 = vmatprep.mubr.bf16.mxu0 %v647
        %1488 = vmatmul.mubr.bf16.gmra.mxu0 %v646
        %v1489 = vpop.f32.mrf.mxu0
        %v1490 = vadd.f32 %v426, %v1489
        %v1491 = vpop.f32.mrf.mxu0
        %v1492 = vpop.f32.mrf.mxu0
        %v1493 = vadd.f32 %v426, %v1492
        %v1494 = vpop.f32.mrf.mxu0
        %1495 = vmatprep.mubr.bf16.mxu0 %v649
        %1496 = vmatmul.mubr.bf16.gmra.mxu0 %v648
        %v1497 = vpop.f32.mrf.mxu0
        %v1498 = vadd.f32 %v426, %v1497
        %v1499 = vpop.f32.mrf.mxu0
        %v1500 = vpop.f32.mrf.mxu0
        %v1501 = vadd.f32 %v426, %v1500
        %v1502 = vpop.f32.mrf.mxu0
        %1503 = vmatprep.mubr.bf16.mxu0 %v651
        %1504 = vmatmul.mubr.bf16.gmra.mxu0 %v650
        %v1505 = vpop.f32.mrf.mxu0
        %v1506 = vadd.f32 %v426, %v1505
        %v1507 = vpop.f32.mrf.mxu0
        %v1508 = vpop.f32.mrf.mxu0
        %v1509 = vadd.f32 %v426, %v1508
        %v1510 = vpop.f32.mrf.mxu0
        %1511 = vmatprep.mubr.bf16.mxu0 %v653
        %1512 = vmatmul.mubr.bf16.gmra.mxu0 %v652
        %v1513 = vpop.f32.mrf.mxu0
        %v1514 = vadd.f32 %v426, %v1513
        %v1515 = vpop.f32.mrf.mxu0
        %v1516 = vpop.f32.mrf.mxu0
        %v1517 = vadd.f32 %v426, %v1516
        %v1518 = vpop.f32.mrf.mxu0
        %1519 = vmatprep.mubr.bf16.mxu0 %v655
        %1520 = vmatmul.mubr.bf16.gmra.mxu0 %v654
        %v1521 = vpop.f32.mrf.mxu0
        %v1522 = vadd.f32 %v426, %v1521
        %v1523 = vpop.f32.mrf.mxu0
        %v1524 = vpop.f32.mrf.mxu0
        %v1525 = vadd.f32 %v426, %v1524
        %v1526 = vpop.f32.mrf.mxu0
        %1527 = vmatprep.mubr.bf16.mxu0 %v657
        %1528 = vmatmul.mubr.bf16.gmra.mxu0 %v656
        %v1529 = vpop.f32.mrf.mxu0
        %v1530 = vadd.f32 %v426, %v1529
        %v1531 = vpop.f32.mrf.mxu0
        %v1532 = vpop.f32.mrf.mxu0
        %v1533 = vadd.f32 %v426, %v1532
        %v1534 = vpop.f32.mrf.mxu0
        %1535 = vmatprep.mubr.bf16.mxu0 %v659
        %1536 = vmatmul.mubr.bf16.gmra.mxu0 %v658
        %v1537 = vpop.f32.mrf.mxu0
        %v1538 = vadd.f32 %v426, %v1537
        %v1539 = vpop.f32.mrf.mxu0
        %v1540 = vpop.f32.mrf.mxu0
        %v1541 = vadd.f32 %v426, %v1540
        %v1542 = vpop.f32.mrf.mxu0
        %1543 = vmatprep.mubr.bf16.mxu0 %v661
        %1544 = vmatmul.mubr.bf16.gmra.mxu0 %v660
        %v1545 = vpop.f32.mrf.mxu0
        %v1546 = vadd.f32 %v426, %v1545
        %v1547 = vpop.f32.mrf.mxu0
        %v1548 = vpop.f32.mrf.mxu0
        %v1549 = vadd.f32 %v426, %v1548
        %v1550 = vpop.f32.mrf.mxu0
        %1551 = vmatprep.mubr.bf16.mxu0 %v663
        %1552 = vmatmul.mubr.bf16.gmra.mxu0 %v662
        %v1553 = vpop.f32.mrf.mxu0
        %v1554 = vadd.f32 %v426, %v1553
        %v1555 = vpop.f32.mrf.mxu0
        %v1556 = vpop.f32.mrf.mxu0
        %v1557 = vadd.f32 %v426, %v1556
        %v1558 = vpop.f32.mrf.mxu0
        %1559 = vmatprep.mubr.bf16.mxu0 %v665
        %1560 = vmatmul.mubr.bf16.gmra.mxu0 %v664
        %v1561 = vpop.f32.mrf.mxu0
        %v1562 = vadd.f32 %v426, %v1561
        %v1563 = vpop.f32.mrf.mxu0
        %v1564 = vpop.f32.mrf.mxu0
        %v1565 = vadd.f32 %v426, %v1564
        %v1566 = vpop.f32.mrf.mxu0
        %1567 = vmatprep.mubr.bf16.mxu0 %v667
        %1568 = vmatmul.mubr.bf16.gmra.mxu0 %v666
        %v1569 = vpop.f32.mrf.mxu0
        %v1570 = vadd.f32 %v426, %v1569
        %v1571 = vpop.f32.mrf.mxu0
        %v1572 = vpop.f32.mrf.mxu0
        %v1573 = vadd.f32 %v426, %v1572
        %v1574 = vpop.f32.mrf.mxu0
        %1575 = vmatprep.mubr.bf16.mxu0 %v669
        %1576 = vmatmul.mubr.bf16.gmra.mxu0 %v668
        %v1577 = vpop.f32.mrf.mxu0
        %v1578 = vadd.f32 %v426, %v1577
        %v1579 = vpop.f32.mrf.mxu0
        %v1580 = vpop.f32.mrf.mxu0
        %v1581 = vadd.f32 %v426, %v1580
        %v1582 = vpop.f32.mrf.mxu0
        %1583 = vmatprep.mubr.bf16.mxu0 %v671
        %1584 = vmatmul.mubr.bf16.gmra.mxu0 %v670
        %v1585 = vpop.f32.mrf.mxu0
        %v1586 = vadd.f32 %v426, %v1585
        %v1587 = vpop.f32.mrf.mxu0
        %v1588 = vpop.f32.mrf.mxu0
        %v1589 = vadd.f32 %v426, %v1588
        %v1590 = vpop.f32.mrf.mxu0
        %1591 = vmatprep.mubr.bf16.mxu0 %v673
        %1592 = vmatmul.mubr.bf16.gmra.mxu0 %v672
        %v1593 = vpop.f32.mrf.mxu0
        %v1594 = vadd.f32 %v426, %v1593
        %v1595 = vpop.f32.mrf.mxu0
        %v1596 = vpop.f32.mrf.mxu0
        %v1597 = vadd.f32 %v426, %v1596
        %v1598 = vpop.f32.mrf.mxu0
        %1599 = vmatprep.mubr.bf16.mxu0 %v675
        %1600 = vmatmul.mubr.bf16.gmra.mxu0 %v674
        %v1601 = vpop.f32.mrf.mxu0
        %v1602 = vadd.f32 %v426, %v1601
        %v1603 = vpop.f32.mrf.mxu0
        %v1604 = vpop.f32.mrf.mxu0
        %v1605 = vadd.f32 %v426, %v1604
        %v1606 = vpop.f32.mrf.mxu0
        %1607 = vmatprep.mubr.bf16.mxu0 %v677
        %1608 = vmatmul.mubr.bf16.gmra.mxu0 %v676
        %v1609 = vpop.f32.mrf.mxu0
        %v1610 = vadd.f32 %v426, %v1609
        %v1611 = vpop.f32.mrf.mxu0
        %v1612 = vpop.f32.mrf.mxu0
        %v1613 = vadd.f32 %v426, %v1612
        %v1614 = vpop.f32.mrf.mxu0
        %1615 = vmatprep.mubr.bf16.mxu0 %v679
        %1616 = vmatmul.mubr.bf16.gmra.mxu0 %v678
        %v1617 = vpop.f32.mrf.mxu0
        %v1618 = vadd.f32 %v426, %v1617
        %v1619 = vpop.f32.mrf.mxu0
        %v1620 = vpop.f32.mrf.mxu0
        %v1621 = vadd.f32 %v426, %v1620
        %v1622 = vpop.f32.mrf.mxu0
        %1623 = vmatprep.mubr.bf16.mxu0 %v681
        %1624 = vmatmul.mubr.bf16.gmra.mxu0 %v680
        %v1625 = vpop.f32.mrf.mxu0
        %v1626 = vadd.f32 %v426, %v1625
        %v1627 = vpop.f32.mrf.mxu0
        %v1628 = vpop.f32.mrf.mxu0
        %v1629 = vadd.f32 %v426, %v1628
        %v1630 = vpop.f32.mrf.mxu0
        %1631 = vmatprep.mubr.bf16.mxu0 %v683
        %1632 = vmatmul.mubr.bf16.gmra.mxu0 %v682
        %v1633 = vpop.f32.mrf.mxu0
        %v1634 = vadd.f32 %v426, %v1633
        %v1635 = vpop.f32.mrf.mxu0
        %v1636 = vpop.f32.mrf.mxu0
        %v1637 = vadd.f32 %v426, %v1636
        %v1638 = vpop.f32.mrf.mxu0
        %1639 = vmatprep.mubr.bf16.mxu0 %v685
        %1640 = vmatmul.mubr.bf16.gmra.mxu0 %v684
        %v1641 = vpop.f32.mrf.mxu0
        %v1642 = vadd.f32 %v426, %v1641
        %v1643 = vpop.f32.mrf.mxu0
        %v1644 = vpop.f32.mrf.mxu0
        %v1645 = vadd.f32 %v426, %v1644
        %v1646 = vpop.f32.mrf.mxu0
        %1647 = vdwg.mxu0
        %v1648 = vpack.c.bf16 %v1045, %v1041
        %v1649 = vpack.c.bf16 %v1047, %v1043
        %v1650 = vpack.c.bf16 %v1397, %v1394
        %v1651 = vpack.c.bf16 %v1055, %v1051
        %v1652 = vpack.c.bf16 %v1057, %v1053
        %v1653 = vpack.c.bf16 %v1405, %v1402
        %v1654 = vpack.c.bf16 %v1065, %v1061
        %v1655 = vpack.c.bf16 %v1067, %v1063
        %v1656 = vpack.c.bf16 %v1413, %v1410
        %v1657 = vpack.c.bf16 %v1075, %v1071
        %v1658 = vpack.c.bf16 %v1077, %v1073
        %v1659 = vpack.c.bf16 %v1421, %v1418
        %v1660 = vpack.c.bf16 %v1085, %v1081
        %v1661 = vpack.c.bf16 %v1087, %v1083
        %v1662 = vpack.c.bf16 %v1429, %v1426
        %v1663 = vpack.c.bf16 %v1095, %v1091
        %v1664 = vpack.c.bf16 %v1097, %v1093
        %v1665 = vpack.c.bf16 %v1437, %v1434
        %v1666 = vpack.c.bf16 %v1105, %v1101
        %v1667 = vpack.c.bf16 %v1107, %v1103
        %v1668 = vpack.c.bf16 %v1445, %v1442
        %v1669 = vpack.c.bf16 %v1115, %v1111
        %v1670 = vpack.c.bf16 %v1117, %v1113
        %v1671 = vpack.c.bf16 %v1453, %v1450
        %v1672 = vpack.c.bf16 %v1125, %v1121
        %v1673 = vpack.c.bf16 %v1127, %v1123
        %v1674 = vpack.c.bf16 %v1461, %v1458
        %v1675 = vpack.c.bf16 %v1135, %v1131
        %v1676 = vpack.c.bf16 %v1137, %v1133
        %v1677 = vpack.c.bf16 %v1469, %v1466
        %v1678 = vpack.c.bf16 %v1145, %v1141
        %v1679 = vpack.c.bf16 %v1147, %v1143
        %v1680 = vpack.c.bf16 %v1477, %v1474
        %v1681 = vpack.c.bf16 %v1155, %v1151
        %v1682 = vpack.c.bf16 %v1157, %v1153
        %v1683 = vpack.c.bf16 %v1485, %v1482
        %v1684 = vpack.c.bf16 %v1165, %v1161
        %v1685 = vpack.c.bf16 %v1167, %v1163
        %v1686 = vpack.c.bf16 %v1493, %v1490
        %v1687 = vpack.c.bf16 %v1175, %v1171
        %v1688 = vpack.c.bf16 %v1177, %v1173
        %v1689 = vpack.c.bf16 %v1501, %v1498
        %v1690 = vpack.c.bf16 %v1185, %v1181
        %v1691 = vpack.c.bf16 %v1187, %v1183
        %v1692 = vpack.c.bf16 %v1509, %v1506
        %v1693 = vpack.c.bf16 %v1195, %v1191
        %v1694 = vpack.c.bf16 %v1197, %v1193
        %v1695 = vpack.c.bf16 %v1517, %v1514
        %v1696 = vpack.c.bf16 %v1205, %v1201
        %v1697 = vpack.c.bf16 %v1207, %v1203
        %v1698 = vpack.c.bf16 %v1525, %v1522
        %v1699 = vpack.c.bf16 %v1215, %v1211
        %v1700 = vpack.c.bf16 %v1217, %v1213
        %v1701 = vpack.c.bf16 %v1533, %v1530
        %v1702 = vpack.c.bf16 %v1225, %v1221
        %v1703 = vpack.c.bf16 %v1227, %v1223
        %v1704 = vpack.c.bf16 %v1541, %v1538
        %v1705 = vpack.c.bf16 %v1235, %v1231
        %v1706 = vpack.c.bf16 %v1237, %v1233
        %v1707 = vpack.c.bf16 %v1549, %v1546
        %v1708 = vpack.c.bf16 %v1245, %v1241
        %v1709 = vpack.c.bf16 %v1247, %v1243
        %v1710 = vpack.c.bf16 %v1557, %v1554
        %v1711 = vpack.c.bf16 %v1255, %v1251
        %v1712 = vpack.c.bf16 %v1257, %v1253
        %v1713 = vpack.c.bf16 %v1565, %v1562
        %v1714 = vpack.c.bf16 %v1265, %v1261
        %v1715 = vpack.c.bf16 %v1267, %v1263
        %v1716 = vpack.c.bf16 %v1573, %v1570
        %v1717 = vpack.c.bf16 %v1275, %v1271
        %v1718 = vpack.c.bf16 %v1277, %v1273
        %v1719 = vpack.c.bf16 %v1581, %v1578
        %v1720 = vpack.c.bf16 %v1285, %v1281
        %v1721 = vpack.c.bf16 %v1287, %v1283
        %v1722 = vpack.c.bf16 %v1589, %v1586
        %v1723 = vpack.c.bf16 %v1295, %v1291
        %v1724 = vpack.c.bf16 %v1297, %v1293
        %v1725 = vpack.c.bf16 %v1597, %v1594
        %v1726 = vpack.c.bf16 %v1305, %v1301
        %v1727 = vpack.c.bf16 %v1307, %v1303
        %v1728 = vpack.c.bf16 %v1605, %v1602
        %v1729 = vpack.c.bf16 %v1315, %v1311
        %v1730 = vpack.c.bf16 %v1317, %v1313
        %v1731 = vpack.c.bf16 %v1613, %v1610
        %v1732 = vpack.c.bf16 %v1325, %v1321
        %v1733 = vpack.c.bf16 %v1327, %v1323
        %v1734 = vpack.c.bf16 %v1621, %v1618
        %v1735 = vpack.c.bf16 %v1335, %v1331
        %v1736 = vpack.c.bf16 %v1337, %v1333
        %v1737 = vpack.c.bf16 %v1629, %v1626
        %v1738 = vpack.c.bf16 %v1345, %v1341
        %v1739 = vpack.c.bf16 %v1347, %v1343
        %v1740 = vpack.c.bf16 %v1637, %v1634
        %v1741 = vpack.c.bf16 %v1355, %v1351
        %v1742 = vpack.c.bf16 %v1357, %v1353
        %v1743 = vpack.c.bf16 %v1645, %v1642
        %v1840 = vunpack.c.l.b16 %v1648
        %v1841 = vunpack.c.l.b16 %v1649
        %v1842 = vunpack.c.l.b16 %v1650
        %v1843 = vunpack.c.h.b16 %v1648
        %v1844 = vunpack.c.h.b16 %v1649
        %v1845 = vunpack.c.h.b16 %v1650
        %v1846 = vunpack.c.l.b16 %v1651
        %v1847 = vunpack.c.l.b16 %v1652
        %v1848 = vunpack.c.l.b16 %v1653
        %v1849 = vunpack.c.h.b16 %v1651
        %v1850 = vunpack.c.h.b16 %v1652
        %v1851 = vunpack.c.h.b16 %v1653
        %v1852 = vunpack.c.l.b16 %v1654
        %v1853 = vunpack.c.l.b16 %v1655
        %v1854 = vunpack.c.l.b16 %v1656
        %v1855 = vunpack.c.h.b16 %v1654
        %v1856 = vunpack.c.h.b16 %v1655
        %v1857 = vunpack.c.h.b16 %v1656
        %v1858 = vunpack.c.l.b16 %v1657
        %v1859 = vunpack.c.l.b16 %v1658
        %v1860 = vunpack.c.l.b16 %v1659
        %v1861 = vunpack.c.h.b16 %v1657
        %v1862 = vunpack.c.h.b16 %v1658
        %v1863 = vunpack.c.h.b16 %v1659
        %v1864 = vunpack.c.l.b16 %v1660
        %v1865 = vunpack.c.l.b16 %v1661
        %v1866 = vunpack.c.l.b16 %v1662
        %v1867 = vunpack.c.h.b16 %v1660
        %v1868 = vunpack.c.h.b16 %v1661
        %v1869 = vunpack.c.h.b16 %v1662
        %v1870 = vunpack.c.l.b16 %v1663
        %v1871 = vunpack.c.l.b16 %v1664
        %v1872 = vunpack.c.l.b16 %v1665
        %v1873 = vunpack.c.h.b16 %v1663
        %v1874 = vunpack.c.h.b16 %v1664
        %v1875 = vunpack.c.h.b16 %v1665
        %v1876 = vunpack.c.l.b16 %v1666
        %v1877 = vunpack.c.l.b16 %v1667
        %v1878 = vunpack.c.l.b16 %v1668
        %v1879 = vunpack.c.h.b16 %v1666
        %v1880 = vunpack.c.h.b16 %v1667
        %v1881 = vunpack.c.h.b16 %v1668
        %v1882 = vunpack.c.l.b16 %v1669
        %v1883 = vunpack.c.l.b16 %v1670
        %v1884 = vunpack.c.l.b16 %v1671
        %v1885 = vunpack.c.h.b16 %v1669
        %v1886 = vunpack.c.h.b16 %v1670
        %v1887 = vunpack.c.h.b16 %v1671
        %v1888 = vunpack.c.l.b16 %v1672
        %v1889 = vunpack.c.l.b16 %v1673
        %v1890 = vunpack.c.l.b16 %v1674
        %v1891 = vunpack.c.h.b16 %v1672
        %v1892 = vunpack.c.h.b16 %v1673
        %v1893 = vunpack.c.h.b16 %v1674
        %v1894 = vunpack.c.l.b16 %v1675
        %v1895 = vunpack.c.l.b16 %v1676
        %v1896 = vunpack.c.l.b16 %v1677
        %v1897 = vunpack.c.h.b16 %v1675
        %v1898 = vunpack.c.h.b16 %v1676
        %v1899 = vunpack.c.h.b16 %v1677
        %v1900 = vunpack.c.l.b16 %v1678
        %v1901 = vunpack.c.l.b16 %v1679
        %v1902 = vunpack.c.l.b16 %v1680
        %v1903 = vunpack.c.h.b16 %v1678
        %v1904 = vunpack.c.h.b16 %v1679
        %v1905 = vunpack.c.h.b16 %v1680
        %v1906 = vunpack.c.l.b16 %v1681
        %v1907 = vunpack.c.l.b16 %v1682
        %v1908 = vunpack.c.l.b16 %v1683
        %v1909 = vunpack.c.h.b16 %v1681
        %v1910 = vunpack.c.h.b16 %v1682
        %v1911 = vunpack.c.h.b16 %v1683
        %v1912 = vunpack.c.l.b16 %v1684
        %v1913 = vunpack.c.l.b16 %v1685
        %v1914 = vunpack.c.l.b16 %v1686
        %v1915 = vunpack.c.h.b16 %v1684
        %v1916 = vunpack.c.h.b16 %v1685
        %v1917 = vunpack.c.h.b16 %v1686
        %v1918 = vunpack.c.l.b16 %v1687
        %v1919 = vunpack.c.l.b16 %v1688
        %v1920 = vunpack.c.l.b16 %v1689
        %v1921 = vunpack.c.h.b16 %v1687
        %v1922 = vunpack.c.h.b16 %v1688
        %v1923 = vunpack.c.h.b16 %v1689
        %v1924 = vunpack.c.l.b16 %v1690
        %v1925 = vunpack.c.l.b16 %v1691
        %v1926 = vunpack.c.l.b16 %v1692
        %v1927 = vunpack.c.h.b16 %v1690
        %v1928 = vunpack.c.h.b16 %v1691
        %v1929 = vunpack.c.h.b16 %v1692
        %v1930 = vunpack.c.l.b16 %v1693
        %v1931 = vunpack.c.l.b16 %v1694
        %v1932 = vunpack.c.l.b16 %v1695
        %v1933 = vunpack.c.h.b16 %v1693
        %v1934 = vunpack.c.h.b16 %v1694
        %v1935 = vunpack.c.h.b16 %v1695
        %v1936 = vunpack.c.l.b16 %v1696
        %v1937 = vunpack.c.l.b16 %v1697
        %v1938 = vunpack.c.l.b16 %v1698
        %v1939 = vunpack.c.h.b16 %v1696
        %v1940 = vunpack.c.h.b16 %v1697
        %v1941 = vunpack.c.h.b16 %v1698
        %v1942 = vunpack.c.l.b16 %v1699
        %v1943 = vunpack.c.l.b16 %v1700
        %v1944 = vunpack.c.l.b16 %v1701
        %v1945 = vunpack.c.h.b16 %v1699
        %v1946 = vunpack.c.h.b16 %v1700
        %v1947 = vunpack.c.h.b16 %v1701
        %v1948 = vunpack.c.l.b16 %v1702
        %v1949 = vunpack.c.l.b16 %v1703
        %v1950 = vunpack.c.l.b16 %v1704
        %v1951 = vunpack.c.h.b16 %v1702
        %v1952 = vunpack.c.h.b16 %v1703
        %v1953 = vunpack.c.h.b16 %v1704
        %v1954 = vunpack.c.l.b16 %v1705
        %v1955 = vunpack.c.l.b16 %v1706
        %v1956 = vunpack.c.l.b16 %v1707
        %v1957 = vunpack.c.h.b16 %v1705
        %v1958 = vunpack.c.h.b16 %v1706
        %v1959 = vunpack.c.h.b16 %v1707
        %v1960 = vunpack.c.l.b16 %v1708
        %v1961 = vunpack.c.l.b16 %v1709
        %v1962 = vunpack.c.l.b16 %v1710
        %v1963 = vunpack.c.h.b16 %v1708
        %v1964 = vunpack.c.h.b16 %v1709
        %v1965 = vunpack.c.h.b16 %v1710
        %v1966 = vunpack.c.l.b16 %v1711
        %v1967 = vunpack.c.l.b16 %v1712
        %v1968 = vunpack.c.l.b16 %v1713
        %v1969 = vunpack.c.h.b16 %v1711
        %v1970 = vunpack.c.h.b16 %v1712
        %v1971 = vunpack.c.h.b16 %v1713
        %v1972 = vunpack.c.l.b16 %v1714
        %v1973 = vunpack.c.l.b16 %v1715
        %v1974 = vunpack.c.l.b16 %v1716
        %v1975 = vunpack.c.h.b16 %v1714
        %v1976 = vunpack.c.h.b16 %v1715
        %v1977 = vunpack.c.h.b16 %v1716
        %v1978 = vunpack.c.l.b16 %v1717
        %v1979 = vunpack.c.l.b16 %v1718
        %v1980 = vunpack.c.l.b16 %v1719
        %v1981 = vunpack.c.h.b16 %v1717
        %v1982 = vunpack.c.h.b16 %v1718
        %v1983 = vunpack.c.h.b16 %v1719
        %v1984 = vunpack.c.l.b16 %v1720
        %v1985 = vunpack.c.l.b16 %v1721
        %v1986 = vunpack.c.l.b16 %v1722
        %v1987 = vunpack.c.h.b16 %v1720
        %v1988 = vunpack.c.h.b16 %v1721
        %v1989 = vunpack.c.h.b16 %v1722
        %v1990 = vunpack.c.l.b16 %v1723
        %v1991 = vunpack.c.l.b16 %v1724
        %v1992 = vunpack.c.l.b16 %v1725
        %v1993 = vunpack.c.h.b16 %v1723
        %v1994 = vunpack.c.h.b16 %v1724
        %v1995 = vunpack.c.h.b16 %v1725
        %v1996 = vunpack.c.l.b16 %v1726
        %v1997 = vunpack.c.l.b16 %v1727
        %v1998 = vunpack.c.l.b16 %v1728
        %v1999 = vunpack.c.h.b16 %v1726
        %v2000 = vunpack.c.h.b16 %v1727
        %v2001 = vunpack.c.h.b16 %v1728
        %v2002 = vunpack.c.l.b16 %v1729
        %v2003 = vunpack.c.l.b16 %v1730
        %v2004 = vunpack.c.l.b16 %v1731
        %v2005 = vunpack.c.h.b16 %v1729
        %v2006 = vunpack.c.h.b16 %v1730
        %v2007 = vunpack.c.h.b16 %v1731
        %v2008 = vunpack.c.l.b16 %v1732
        %v2009 = vunpack.c.l.b16 %v1733
        %v2010 = vunpack.c.l.b16 %v1734
        %v2011 = vunpack.c.h.b16 %v1732
        %v2012 = vunpack.c.h.b16 %v1733
        %v2013 = vunpack.c.h.b16 %v1734
        %v2014 = vunpack.c.l.b16 %v1735
        %v2015 = vunpack.c.l.b16 %v1736
        %v2016 = vunpack.c.l.b16 %v1737
        %v2017 = vunpack.c.h.b16 %v1735
        %v2018 = vunpack.c.h.b16 %v1736
        %v2019 = vunpack.c.h.b16 %v1737
        %v2020 = vunpack.c.l.b16 %v1738
        %v2021 = vunpack.c.l.b16 %v1739
        %v2022 = vunpack.c.l.b16 %v1740
        %v2023 = vunpack.c.h.b16 %v1738
        %v2024 = vunpack.c.h.b16 %v1739
        %v2025 = vunpack.c.h.b16 %v1740
        %v2026 = vunpack.c.l.b16 %v1741
        %v2027 = vunpack.c.l.b16 %v1742
        %v2028 = vunpack.c.l.b16 %v1743
        %v2029 = vunpack.c.h.b16 %v1741
        %v2030 = vunpack.c.h.b16 %v1742
        %v2031 = vunpack.c.h.b16 %v1743
        %v2032 = vpack.c.b16 %v1841, %v1840
        %v2033 = vpack.c.b16 %v1842, %v1842
        %v2034 = vpack.c.b16 %v1844, %v1843
        %v2035 = vpack.c.b16 %v1845, %v1845
        %v2036 = vpack.c.b16 %v1847, %v1846
        %v2037 = vpack.c.b16 %v1848, %v1848
        %v2038 = vpack.c.b16 %v1850, %v1849
        %v2039 = vpack.c.b16 %v1851, %v1851
        %v2040 = vpack.c.b16 %v1853, %v1852
        %v2041 = vpack.c.b16 %v1854, %v1854
        %v2042 = vpack.c.b16 %v1856, %v1855
        %v2043 = vpack.c.b16 %v1857, %v1857
        %v2044 = vpack.c.b16 %v1859, %v1858
        %v2045 = vpack.c.b16 %v1860, %v1860
        %v2046 = vpack.c.b16 %v1862, %v1861
        %v2047 = vpack.c.b16 %v1863, %v1863
        %v2048 = vpack.c.b16 %v1865, %v1864
        %v2049 = vpack.c.b16 %v1866, %v1866
        %v2050 = vpack.c.b16 %v1868, %v1867
        %v2051 = vpack.c.b16 %v1869, %v1869
        %v2052 = vpack.c.b16 %v1871, %v1870
        %v2053 = vpack.c.b16 %v1872, %v1872
        %v2054 = vpack.c.b16 %v1874, %v1873
        %v2055 = vpack.c.b16 %v1875, %v1875
        %v2056 = vpack.c.b16 %v1877, %v1876
        %v2057 = vpack.c.b16 %v1878, %v1878
        %v2058 = vpack.c.b16 %v1880, %v1879
        %v2059 = vpack.c.b16 %v1881, %v1881
        %v2060 = vpack.c.b16 %v1883, %v1882
        %v2061 = vpack.c.b16 %v1884, %v1884
        %v2062 = vpack.c.b16 %v1886, %v1885
        %v2063 = vpack.c.b16 %v1887, %v1887
        %v2064 = vpack.c.b16 %v1889, %v1888
        %v2065 = vpack.c.b16 %v1890, %v1890
        %v2066 = vpack.c.b16 %v1892, %v1891
        %v2067 = vpack.c.b16 %v1893, %v1893
        %v2068 = vpack.c.b16 %v1895, %v1894
        %v2069 = vpack.c.b16 %v1896, %v1896
        %v2070 = vpack.c.b16 %v1898, %v1897
        %v2071 = vpack.c.b16 %v1899, %v1899
        %v2072 = vpack.c.b16 %v1901, %v1900
        %v2073 = vpack.c.b16 %v1902, %v1902
        %v2074 = vpack.c.b16 %v1904, %v1903
        %v2075 = vpack.c.b16 %v1905, %v1905
        %v2076 = vpack.c.b16 %v1907, %v1906
        %v2077 = vpack.c.b16 %v1908, %v1908
        %v2078 = vpack.c.b16 %v1910, %v1909
        %v2079 = vpack.c.b16 %v1911, %v1911
        %v2080 = vpack.c.b16 %v1913, %v1912
        %v2081 = vpack.c.b16 %v1914, %v1914
        %v2082 = vpack.c.b16 %v1916, %v1915
        %v2083 = vpack.c.b16 %v1917, %v1917
        %v2084 = vpack.c.b16 %v1919, %v1918
        %v2085 = vpack.c.b16 %v1920, %v1920
        %v2086 = vpack.c.b16 %v1922, %v1921
        %v2087 = vpack.c.b16 %v1923, %v1923
        %v2088 = vpack.c.b16 %v1925, %v1924
        %v2089 = vpack.c.b16 %v1926, %v1926
        %v2090 = vpack.c.b16 %v1928, %v1927
        %v2091 = vpack.c.b16 %v1929, %v1929
        %v2092 = vpack.c.b16 %v1931, %v1930
        %v2093 = vpack.c.b16 %v1932, %v1932
        %v2094 = vpack.c.b16 %v1934, %v1933
        %v2095 = vpack.c.b16 %v1935, %v1935
        %v2096 = vpack.c.b16 %v1937, %v1936
        %v2097 = vpack.c.b16 %v1938, %v1938
        %v2098 = vpack.c.b16 %v1940, %v1939
        %v2099 = vpack.c.b16 %v1941, %v1941
        %v2100 = vpack.c.b16 %v1943, %v1942
        %v2101 = vpack.c.b16 %v1944, %v1944
        %v2102 = vpack.c.b16 %v1946, %v1945
        %v2103 = vpack.c.b16 %v1947, %v1947
        %v2104 = vpack.c.b16 %v1949, %v1948
        %v2105 = vpack.c.b16 %v1950, %v1950
        %v2106 = vpack.c.b16 %v1952, %v1951
        %v2107 = vpack.c.b16 %v1953, %v1953
        %v2108 = vpack.c.b16 %v1955, %v1954
        %v2109 = vpack.c.b16 %v1956, %v1956
        %v2110 = vpack.c.b16 %v1958, %v1957
        %v2111 = vpack.c.b16 %v1959, %v1959
        %v2112 = vpack.c.b16 %v1961, %v1960
        %v2113 = vpack.c.b16 %v1962, %v1962
        %v2114 = vpack.c.b16 %v1964, %v1963
        %v2115 = vpack.c.b16 %v1965, %v1965
        %v2116 = vpack.c.b16 %v1967, %v1966
        %v2117 = vpack.c.b16 %v1968, %v1968
        %v2118 = vpack.c.b16 %v1970, %v1969
        %v2119 = vpack.c.b16 %v1971, %v1971
        %v2120 = vpack.c.b16 %v1973, %v1972
        %v2121 = vpack.c.b16 %v1974, %v1974
        %v2122 = vpack.c.b16 %v1976, %v1975
        %v2123 = vpack.c.b16 %v1977, %v1977
        %v2124 = vpack.c.b16 %v1979, %v1978
        %v2125 = vpack.c.b16 %v1980, %v1980
        %v2126 = vpack.c.b16 %v1982, %v1981
        %v2127 = vpack.c.b16 %v1983, %v1983
        %v2128 = vpack.c.b16 %v1985, %v1984
        %v2129 = vpack.c.b16 %v1986, %v1986
        %v2130 = vpack.c.b16 %v1988, %v1987
        %v2131 = vpack.c.b16 %v1989, %v1989
        %v2132 = vpack.c.b16 %v1991, %v1990
        %v2133 = vpack.c.b16 %v1992, %v1992
        %v2134 = vpack.c.b16 %v1994, %v1993
        %v2135 = vpack.c.b16 %v1995, %v1995
        %v2136 = vpack.c.b16 %v1997, %v1996
        %v2137 = vpack.c.b16 %v1998, %v1998
        %v2138 = vpack.c.b16 %v2000, %v1999
        %v2139 = vpack.c.b16 %v2001, %v2001
        %v2140 = vpack.c.b16 %v2003, %v2002
        %v2141 = vpack.c.b16 %v2004, %v2004
        %v2142 = vpack.c.b16 %v2006, %v2005
        %v2143 = vpack.c.b16 %v2007, %v2007
        %v2144 = vpack.c.b16 %v2009, %v2008
        %v2145 = vpack.c.b16 %v2010, %v2010
        %v2146 = vpack.c.b16 %v2012, %v2011
        %v2147 = vpack.c.b16 %v2013, %v2013
        %v2148 = vpack.c.b16 %v2015, %v2014
        %v2149 = vpack.c.b16 %v2016, %v2016
        %v2150 = vpack.c.b16 %v2018, %v2017
        %v2151 = vpack.c.b16 %v2019, %v2019
        %v2152 = vpack.c.b16 %v2021, %v2020
        %v2153 = vpack.c.b16 %v2022, %v2022
        %v2154 = vpack.c.b16 %v2024, %v2023
        %v2155 = vpack.c.b16 %v2025, %v2025
        %v2156 = vpack.c.b16 %v2027, %v2026
        %v2157 = vpack.c.b16 %v2028, %v2028
        %v2158 = vpack.c.b16 %v2030, %v2029
        %v2159 = vpack.c.b16 %v2031, %v2031
        %2288 = vst [vmem:[%s278] sm:$0xff] %v2032
        %2289 = vst [vmem:[%s278 + $0x8] sm:$0xf] %v2033
        %2290 = vst [vmem:[%s278 + $0xc] sm:$0xff] %v2034
        %2291 = vst [vmem:[%s278 + $0x14] sm:$0xf] %v2035
        %2292 = vst [vmem:[%s278 + $0x18] sm:$0xff] %v2036
        %2293 = vst [vmem:[%s278 + $0x20] sm:$0xf] %v2037
        %2294 = vst [vmem:[%s278 + $0x24] sm:$0xff] %v2038
        %2295 = vst [vmem:[%s278 + $0x2c] sm:$0xf] %v2039
        %2296 = vst [vmem:[%s278 + $0x30] sm:$0xff] %v2040
        %2297 = vst [vmem:[%s278 + $0x38] sm:$0xf] %v2041
        %2298 = vst [vmem:[%s278 + $0x3c] sm:$0xff] %v2042
        %2299 = vst [vmem:[%s278 + $0x44] sm:$0xf] %v2043
        %2300 = vst [vmem:[%s278 + $0x48] sm:$0xff] %v2044
        %2301 = vst [vmem:[%s278 + $0x50] sm:$0xf] %v2045
        %2302 = vst [vmem:[%s278 + $0x54] sm:$0xff] %v2046
        %2303 = vst [vmem:[%s278 + $0x5c] sm:$0xf] %v2047
        %2304 = vst [vmem:[%s278 + $0x60] sm:$0xff] %v2048
        %2305 = vst [vmem:[%s278 + $0x68] sm:$0xf] %v2049
        %2306 = vst [vmem:[%s278 + $0x6c] sm:$0xff] %v2050
        %2307 = vst [vmem:[%s278 + $0x74] sm:$0xf] %v2051
        %2308 = vst [vmem:[%s278 + $0x78] sm:$0xff] %v2052
        %2309 = vst [vmem:[%s278 + $0x80] sm:$0xf] %v2053
        %2310 = vst [vmem:[%s278 + $0x84] sm:$0xff] %v2054
        %2311 = vst [vmem:[%s278 + $0x8c] sm:$0xf] %v2055
        %2312 = vst [vmem:[%s278 + $0x90] sm:$0xff] %v2056
        %2313 = vst [vmem:[%s278 + $0x98] sm:$0xf] %v2057
        %2314 = vst [vmem:[%s278 + $0x9c] sm:$0xff] %v2058
        %2315 = vst [vmem:[%s278 + $0xa4] sm:$0xf] %v2059
        %2316 = vst [vmem:[%s278 + $0xa8] sm:$0xff] %v2060
        %2317 = vst [vmem:[%s278 + $0xb0] sm:$0xf] %v2061
        %2318 = vst [vmem:[%s278 + $0xb4] sm:$0xff] %v2062
        %2319 = vst [vmem:[%s278 + $0xbc] sm:$0xf] %v2063
        %2320 = vst [vmem:[%s278 + $0xc0] sm:$0xff] %v2064
        %2321 = vst [vmem:[%s278 + $0xc8] sm:$0xf] %v2065
        %2322 = vst [vmem:[%s278 + $0xcc] sm:$0xff] %v2066
        %2323 = vst [vmem:[%s278 + $0xd4] sm:$0xf] %v2067
        %2324 = vst [vmem:[%s278 + $0xd8] sm:$0xff] %v2068
        %2325 = vst [vmem:[%s278 + $0xe0] sm:$0xf] %v2069
        %2326 = vst [vmem:[%s278 + $0xe4] sm:$0xff] %v2070
        %2327 = vst [vmem:[%s278 + $0xec] sm:$0xf] %v2071
        %2328 = vst [vmem:[%s278 + $0xf0] sm:$0xff] %v2072
        %2329 = vst [vmem:[%s278 + $0xf8] sm:$0xf] %v2073
        %2330 = vst [vmem:[%s278 + $0xfc] sm:$0xff] %v2074
        %2331 = vst [vmem:[%s278 + $0x104] sm:$0xf] %v2075
        %2332 = vst [vmem:[%s278 + $0x108] sm:$0xff] %v2076
        %2333 = vst [vmem:[%s278 + $0x110] sm:$0xf] %v2077
        %2334 = vst [vmem:[%s278 + $0x114] sm:$0xff] %v2078
        %2335 = vst [vmem:[%s278 + $0x11c] sm:$0xf] %v2079
        %2336 = vst [vmem:[%s278 + $0x120] sm:$0xff] %v2080
        %2337 = vst [vmem:[%s278 + $0x128] sm:$0xf] %v2081
        %2338 = vst [vmem:[%s278 + $0x12c] sm:$0xff] %v2082
        %2339 = vst [vmem:[%s278 + $0x134] sm:$0xf] %v2083
        %2340 = vst [vmem:[%s278 + $0x138] sm:$0xff] %v2084
        %2341 = vst [vmem:[%s278 + $0x140] sm:$0xf] %v2085
        %2342 = vst [vmem:[%s278 + $0x144] sm:$0xff] %v2086
        %2343 = vst [vmem:[%s278 + $0x14c] sm:$0xf] %v2087
        %2344 = vst [vmem:[%s278 + $0x150] sm:$0xff] %v2088
        %2345 = vst [vmem:[%s278 + $0x158] sm:$0xf] %v2089
        %2346 = vst [vmem:[%s278 + $0x15c] sm:$0xff] %v2090
        %2347 = vst [vmem:[%s278 + $0x164] sm:$0xf] %v2091
        %2348 = vst [vmem:[%s278 + $0x168] sm:$0xff] %v2092
        %2349 = vst [vmem:[%s278 + $0x170] sm:$0xf] %v2093
        %2350 = vst [vmem:[%s278 + $0x174] sm:$0xff] %v2094
        %2351 = vst [vmem:[%s278 + $0x17c] sm:$0xf] %v2095
        %2352 = vst [vmem:[%s278 + $0x180] sm:$0xff] %v2096
        %2353 = vst [vmem:[%s278 + $0x188] sm:$0xf] %v2097
        %2354 = vst [vmem:[%s278 + $0x18c] sm:$0xff] %v2098
        %2355 = vst [vmem:[%s278 + $0x194] sm:$0xf] %v2099
        %2356 = vst [vmem:[%s278 + $0x198] sm:$0xff] %v2100
        %2357 = vst [vmem:[%s278 + $0x1a0] sm:$0xf] %v2101
        %2358 = vst [vmem:[%s278 + $0x1a4] sm:$0xff] %v2102
        %2359 = vst [vmem:[%s278 + $0x1ac] sm:$0xf] %v2103
        %2360 = vst [vmem:[%s278 + $0x1b0] sm:$0xff] %v2104
        %2361 = vst [vmem:[%s278 + $0x1b8] sm:$0xf] %v2105
        %2362 = vst [vmem:[%s278 + $0x1bc] sm:$0xff] %v2106
        %2363 = vst [vmem:[%s278 + $0x1c4] sm:$0xf] %v2107
        %2364 = vst [vmem:[%s278 + $0x1c8] sm:$0xff] %v2108
        %2365 = vst [vmem:[%s278 + $0x1d0] sm:$0xf] %v2109
        %2366 = vst [vmem:[%s278 + $0x1d4] sm:$0xff] %v2110
        %2367 = vst [vmem:[%s278 + $0x1dc] sm:$0xf] %v2111
        %2368 = vst [vmem:[%s278 + $0x1e0] sm:$0xff] %v2112
        %2369 = vst [vmem:[%s278 + $0x1e8] sm:$0xf] %v2113
        %2370 = vst [vmem:[%s278 + $0x1ec] sm:$0xff] %v2114
        %2371 = vst [vmem:[%s278 + $0x1f4] sm:$0xf] %v2115
        %2372 = vst [vmem:[%s278 + $0x1f8] sm:$0xff] %v2116
        %2373 = vst [vmem:[%s278 + $0x200] sm:$0xf] %v2117
        %2374 = vst [vmem:[%s278 + $0x204] sm:$0xff] %v2118
        %2375 = vst [vmem:[%s278 + $0x20c] sm:$0xf] %v2119
        %2376 = vst [vmem:[%s278 + $0x210] sm:$0xff] %v2120
        %2377 = vst [vmem:[%s278 + $0x218] sm:$0xf] %v2121
        %2378 = vst [vmem:[%s278 + $0x21c] sm:$0xff] %v2122
        %2379 = vst [vmem:[%s278 + $0x224] sm:$0xf] %v2123
        %2380 = vst [vmem:[%s278 + $0x228] sm:$0xff] %v2124
        %2381 = vst [vmem:[%s278 + $0x230] sm:$0xf] %v2125
        %2382 = vst [vmem:[%s278 + $0x234] sm:$0xff] %v2126
        %2383 = vst [vmem:[%s278 + $0x23c] sm:$0xf] %v2127
        %2384 = vst [vmem:[%s278 + $0x240] sm:$0xff] %v2128
        %2385 = vst [vmem:[%s278 + $0x248] sm:$0xf] %v2129
        %2386 = vst [vmem:[%s278 + $0x24c] sm:$0xff] %v2130
        %2387 = vst [vmem:[%s278 + $0x254] sm:$0xf] %v2131
        %2388 = vst [vmem:[%s278 + $0x258] sm:$0xff] %v2132
        %2389 = vst [vmem:[%s278 + $0x260] sm:$0xf] %v2133
        %2390 = vst [vmem:[%s278 + $0x264] sm:$0xff] %v2134
        %2391 = vst [vmem:[%s278 + $0x26c] sm:$0xf] %v2135
        %2392 = vst [vmem:[%s278 + $0x270] sm:$0xff] %v2136
        %2393 = vst [vmem:[%s278 + $0x278] sm:$0xf] %v2137
        %2394 = vst [vmem:[%s278 + $0x27c] sm:$0xff] %v2138
        %2395 = vst [vmem:[%s278 + $0x284] sm:$0xf] %v2139
        %2396 = vst [vmem:[%s278 + $0x288] sm:$0xff] %v2140
        %2397 = vst [vmem:[%s278 + $0x290] sm:$0xf] %v2141
        %2398 = vst [vmem:[%s278 + $0x294] sm:$0xff] %v2142
        %2399 = vst [vmem:[%s278 + $0x29c] sm:$0xf] %v2143
        %2400 = vst [vmem:[%s278 + $0x2a0] sm:$0xff] %v2144
        %2401 = vst [vmem:[%s278 + $0x2a8] sm:$0xf] %v2145
        %2402 = vst [vmem:[%s278 + $0x2ac] sm:$0xff] %v2146
        %2403 = vst [vmem:[%s278 + $0x2b4] sm:$0xf] %v2147
        %2404 = vst [vmem:[%s278 + $0x2b8] sm:$0xff] %v2148
        %2405 = vst [vmem:[%s278 + $0x2c0] sm:$0xf] %v2149
        %2406 = vst [vmem:[%s278 + $0x2c4] sm:$0xff] %v2150
        %2407 = vst [vmem:[%s278 + $0x2cc] sm:$0xf] %v2151
        %2408 = vst [vmem:[%s278 + $0x2d0] sm:$0xff] %v2152
        %2409 = vst [vmem:[%s278 + $0x2d8] sm:$0xf] %v2153
        %2410 = vst [vmem:[%s278 + $0x2dc] sm:$0xff] %v2154
        %2411 = vst [vmem:[%s278 + $0x2e4] sm:$0xf] %v2155
        %2412 = vst [vmem:[%s278 + $0x2e8] sm:$0xff] %v2156
        %2413 = vst [vmem:[%s278 + $0x2f0] sm:$0xf] %v2157
        %2414 = vst [vmem:[%s278 + $0x2f4] sm:$0xff] %v2158
        %2415 = vst [vmem:[%s278 + $0x2fc] sm:$0xf] %v2159
        %s2416 = sand.u32 %s123, 1
        %s2417 = scalar_lea.sflag [#allocation4], %s2416
        %s2418 = sand.u32 %s123, 1
        %s2419 = smul.addr %s2418, 768
        %s2420 = scalar_lea.vmem [#allocation8], %s2419
        // Predicated region
        $region45: #{tpu_custom_call.1} parent=31 // pred_check
          %p2421 = pneg %p133
        $region46: #{tpu_custom_call.1} parent=31 // pred_check_branch
          %2423 = sbr.rel (%p2421) target = $region48
        $region47: #{tpu_custom_call.1} parent=31 // pred_region
          %s2424 = smul.u32 64, %s27
          %s2425 = smul.u32 3, %s28
          %s2427 = ssub.s32 12288, 12288
          %2428 = vsyncadd %s2417, %s2427
          %s2429 = smul.addr %s2424, 6
          %s2430 = sadd.s32 %s2425, %s2429
          %s2431 = smul.addr %s2430, 64
          %s2432 = scalar_lea.hbm %s3, %s2431
          %s2433 = sshll.u32 %s2420, 4
          %s2434 = int_to_ptr.vmem [resolvable:$true] %s2433
          %2439 = dma.vmem_to_hbm [thread:$0]  %s2434, 12288, %s2432, %s2417, 192, 384, 12
        $region48: #{tpu_custom_call.1} parent=31 // pred_fallthru
          _
      $region32: #{tpu_custom_call.1} parent=5 // pred_fallthru
        _
      %p2440 = scmp.le.s32.totalorder 2, %s18
      // Predicated region
      $region49: #{tpu_custom_call.1} parent=5 // pred_check
        %p2441 = pneg %p2440
      $region50: #{tpu_custom_call.1} parent=5 // pred_check_branch
        %2443 = sbr.rel (%p2441) target = $region52
      $region51: #{tpu_custom_call.1} parent=5 // pred_region
        %s2444 = ssub.s32 %s18, 2
        // Predicated region
        $region53: #{tpu_custom_call.1} parent=51 // pred_check
          %p2445 = pneg %p139
        $region54: #{tpu_custom_call.1} parent=51 // pred_check_branch
          %2447 = sbr.rel (%p2445) target = $region56
        $region55: #{tpu_custom_call.1} parent=51 // pred_region
          %s2448 = sand.u32 %s124, 1
          %s2449 = scalar_lea.sflag [#allocation4], %s2448
          %s2450 = sand.u32 %s124, 1
          %s2451 = smul.addr %s2450, 768
          %s2452 = scalar_lea.vmem [#allocation8], %s2451
          %2453 = dma.done %s2449, 12288
        $region56: #{tpu_custom_call.1} parent=51 // pred_fallthru
          _
      $region52: #{tpu_custom_call.1} parent=5 // pred_fallthru
        _
    $region6: #{tpu_custom_call.1} parent=1 // loop_footer
      %s22 = sadd.s32 1, %s18
    $region7: #{tpu_custom_call.1} parent=1 // loop_footer_branch
      %17 = sbr.rel target = $region3
    $region8: #{tpu_custom_call.1} parent=1 // loop_exit
      _
    %2454 = vsyncpa [#allocation3], 1
    %s2455 = scalar_lea.sflag [#allocation3], 1
    %2456 = vsyncpa %s2455, 1
    %2457 = vsyncpa [#allocation6], 1
    %s2458 = scalar_lea.sflag [#allocation6], 1
    %2459 = vsyncpa %s2458, 1
    %2460 = vsyncpa [#allocation4], 1
    %s2461 = scalar_lea.sflag [#allocation4], 1
    %2462 = vsyncpa %s2461, 1

</llo_original>
